<compile_context>
chip_gen: v6e
topology: v6e:2x2x1
jax: 0.10.0
libtpu: 0.0.40
codegen_flags: <defaults>
</compile_context>

<pallas_src>
import functools

import jax
import jax.numpy as jnp
from jax.experimental import pallas as pl
from jax.experimental.pallas import tpu as pltpu


def _layernorm(x, gamma, beta, eps=1e-5):
    mean = jnp.mean(x, axis=-1, keepdims=True)
    var = jnp.mean((x - mean) ** 2, axis=-1, keepdims=True)
    return (x - mean) * jax.lax.rsqrt(var + eps) * gamma + beta


def _pair_bias_attn_kernel(
    xq_ref, xkv_ref, pairs_ref,
    ln_in_w_ref, ln_in_b_ref,
    wq_ref, wkv_ref,
    wo_ref, bo_ref,
    ln_p_w_ref, ln_p_b_ref,
    wp_ref,
    o_ref,
    k_scr, v_scr,
    *, num_heads, head_dim, scaling,
):
    H, D = num_heads, head_dim
    E = H * D

    # ---- K/V for the full (source) sequence: compute once per batch. ----
    @pl.when(pl.program_id(1) == 0)
    def _():
        x_full = xkv_ref[...].astype(jnp.float32)                      # (S, E)
        x_ln = _layernorm(x_full, ln_in_w_ref[0, :], ln_in_b_ref[0, :])
        # Pre-transposed, fused [Wk^T | Wv^T]: one (S,E)@(E,2E) matmul.
        kv = jnp.dot(x_ln, wkv_ref[...], preferred_element_type=jnp.float32)
        S = kv.shape[0]
        # Store head-major (H, S, D) so the relayout happens once per batch.
        k_scr[...] = jnp.transpose(kv[:, :E].reshape(S, H, D), (1, 0, 2))
        v_scr[...] = jnp.transpose(kv[:, E:].reshape(S, H, D), (1, 0, 2))

    # ---- Q for this query tile. ----
    xq = xq_ref[...].astype(jnp.float32)                               # (TQ, E)
    xq_ln = _layernorm(xq, ln_in_w_ref[0, :], ln_in_b_ref[0, :])
    q = jnp.dot(xq_ln, wq_ref[...], preferred_element_type=jnp.float32) * scaling
    TQ = q.shape[0]
    qh = jnp.transpose(q.reshape(TQ, H, D), (1, 0, 2))                 # (H, TQ, D)

    kh = k_scr[...]                                                    # (H, S, D)
    vh = v_scr[...]                                                    # (H, S, D)

    # ---- Attention scores: all heads in one batched matmul. ----
    scores = jnp.einsum("htd,hsd->hts", qh, kh,
                        preferred_element_type=jnp.float32)            # (H, TQ, S)

    # ---- Pair bias, lane-dense as (H, TQ*S). ----
    pairs = pairs_ref[...].astype(jnp.float32)                         # (TQ, S, P)
    _, S, P = pairs.shape
    p_ln = _layernorm(pairs, ln_p_w_ref[0, :], ln_p_b_ref[0, :])
    pw = jax.lax.dot_general(
        wp_ref[...].astype(jnp.float32), p_ln.reshape(TQ * S, P),
        dimension_numbers=(((1,), (1,)), ((), ())),
        preferred_element_type=jnp.float32)                            # (H, TQ*S)
    scores = scores + pw.reshape(H, TQ, S)

    # ---- Softmax; normalize after probs @ V. ----
    m = jnp.max(scores, axis=-1, keepdims=True)                        # (H, TQ, 1)
    e = jnp.exp(scores - m)
    l = jnp.sum(e, axis=-1, keepdims=True)                             # (H, TQ, 1)
    ctx = jnp.einsum("hts,hsd->htd", e, vh,
                     preferred_element_type=jnp.float32)               # (H, TQ, D)
    ctx = ctx * pl.reciprocal(l, approx=False)

    # ---- Merge heads + output projection. ----
    attn = jnp.transpose(ctx, (1, 0, 2)).reshape(TQ, E)                # (TQ, E)
    out = jnp.dot(attn, wo_ref[...], preferred_element_type=jnp.float32) + bo_ref[0, :]
    o_ref[...] = out.astype(o_ref.dtype)


def pair_bias_self_attention(query, pairs, params, num_heads, *, q_block=128):
    """query: (T, B, E); pairs: (B, T, S, P)  ->  (T, B, E)."""
    T, B, E = query.shape
    _, _, S, P = pairs.shape
    assert S == T, "self-attention: src_len == tgt_len"
    head_dim = E // num_heads
    scaling = head_dim ** (-0.5)

    # Query-tile size: multiple of 8 (or full T) to respect TPU tiling.
    TQ = q_block if (T % q_block == 0) else T
    n_qt = T // TQ

    # Batch-major activations.  (The transpose pair could be removed by
    # indexing the (T, B, E) layout directly once sub-full second-minor
    # blocks are safe; kept here for portability.)
    x = jnp.transpose(query, (1, 0, 2))                                # (B, T, E)

    # One-time wrapper-side weight prep: (out,in) -> (in,out), fuse K and V.
    wq_t = jnp.transpose(params["wq"])                                 # (E, E)
    wkv_t = jnp.concatenate(
        [jnp.transpose(params["wk"]), jnp.transpose(params["wv"])], axis=1)  # (E, 2E)
    wo_t = jnp.transpose(params["wo"])                                 # (E, E)

    kernel = functools.partial(
        _pair_bias_attn_kernel,
        num_heads=num_heads, head_dim=head_dim, scaling=scaling)

    def const(shape):
        n = len(shape)
        return pl.BlockSpec(shape, lambda b, t, _n=n: (0,) * _n)

    out = pl.pallas_call(
        kernel,
        out_shape=jax.ShapeDtypeStruct((B, T, E), query.dtype),
        grid=(B, n_qt),
        in_specs=[
            pl.BlockSpec((None, TQ, E), lambda b, t: (b, t, 0)),       # Q tile
            pl.BlockSpec((None, T, E), lambda b, t: (b, 0, 0)),        # full seq (K/V)
            pl.BlockSpec((None, TQ, S, P), lambda b, t: (b, t, 0, 0)), # pairs tile
            const((1, E)), const((1, E)),                              # LN(input) w, b
            const((E, E)),                                             # Wq^T
            const((E, 2 * E)),                                         # [Wk^T | Wv^T]
            const((E, E)), const((1, E)),                              # Wo^T, bo
            const((1, P)), const((1, P)),                              # LN(pairs) w, b
            const((num_heads, P)),                                     # Wp
        ],
        out_specs=pl.BlockSpec((None, TQ, E), lambda b, t: (b, t, 0)),
        scratch_shapes=[
            pltpu.VMEM((num_heads, T, head_dim), jnp.float32),         # K head-major
            pltpu.VMEM((num_heads, T, head_dim), jnp.float32),         # V head-major
        ],
        compiler_params=pltpu.CompilerParams(
            dimension_semantics=("parallel", "arbitrary"),
            vmem_limit_bytes=64 * 1024 * 1024,
        ),
    )(
        x, x, pairs,
        params["ln_in_w"].reshape(1, E), params["ln_in_b"].reshape(1, E),
        wq_t, wkv_t,
        wo_t, params["bo"].reshape(1, E),
        params["ln_p_w"].reshape(1, P), params["ln_p_b"].reshape(1, P),
        params["wp"],
    )

    return jnp.transpose(out, (1, 0, 2))                               # (T, B, E)


def _reference(query, pairs, params, num_heads):
    """Pure-JAX mirror of the PyTorch forward (need_weights=False path)."""
    T, B, E = query.shape
    head_dim = E // num_heads
    scaling = head_dim ** (-0.5)

    x = _layernorm(query, params["ln_in_w"], params["ln_in_b"])
    q = jnp.einsum("tbe,fe->tbf", x, params["wq"]) * scaling
    k = jnp.einsum("tbe,fe->tbf", x, params["wk"])
    v = jnp.einsum("tbe,fe->tbf", x, params["wv"])

    def split_heads(t):  # (T, B, E) -> (B, H, T, D)
        return jnp.transpose(t.reshape(T, B, num_heads, head_dim), (1, 2, 0, 3))

    q, k, v = split_heads(q), split_heads(k), split_heads(v)
    attn_w = jnp.einsum("bhtd,bhsd->bhts", q, k)

    p_ln = _layernorm(pairs, params["ln_p_w"], params["ln_p_b"])
    pair_w = jnp.einsum("btsp,hp->bhts", p_ln, params["wp"])
    attn_w = attn_w + pair_w
    attn_w = jax.nn.softmax(attn_w, axis=-1)

    attn = jnp.einsum("bhts,bhsd->bhtd", attn_w, v)
    attn = jnp.transpose(attn, (2, 0, 1, 3)).reshape(T, B, E)
    return jnp.einsum("tbe,fe->tbf", attn, params["wo"]) + params["bo"]


if __name__ == "__main__":
    # Small, module-consistent shapes.
    tgt_len, bsz = 8, 2
    embed_dim, pairs_dim, num_heads = 32, 16, 4

    key = jax.random.PRNGKey(0)
    keys = jax.random.split(key, 12)

    # Deterministic synthetic parameters (same shapes as the nn.Module;
    # out_proj is intentionally non-zero so the output is non-trivial).
    params = {
        "ln_in_w": jnp.ones((embed_dim,), jnp.float32),
        "ln_in_b": jnp.zeros((embed_dim,), jnp.float32),
        "wq": jax.random.normal(keys[0], (embed_dim, embed_dim), jnp.float32) * 0.1,
        "wk": jax.random.normal(keys[1], (embed_dim, embed_dim), jnp.float32) * 0.1,
        "wv": jax.random.normal(keys[2], (embed_dim, embed_dim), jnp.float32) * 0.1,
        "wo": jax.random.normal(keys[3], (embed_dim, embed_dim), jnp.float32) * 0.1,
        "bo": jax.random.normal(keys[4], (embed_dim,), jnp.float32) * 0.1,
        "ln_p_w": jnp.ones((pairs_dim,), jnp.float32),
        "ln_p_b": jnp.zeros((pairs_dim,), jnp.float32),
        "wp": jax.random.normal(keys[5], (num_heads, pairs_dim), jnp.float32) * 0.1,
    }

    query = jax.random.normal(keys[6], (tgt_len, bsz, embed_dim), jnp.float32)
    pairs = jax.random.normal(keys[7], (bsz, tgt_len, tgt_len, pairs_dim), jnp.float32)

    out = pair_bias_self_attention(query, pairs, params, num_heads)
    out = jax.block_until_ready(out)

    ref = _reference(query, pairs, params, num_heads)
    assert out.shape == (tgt_len, bsz, embed_dim)
    assert jnp.allclose(out, ref, atol=1e-4, rtol=1e-4), \
        float(jnp.max(jnp.abs(out - ref)))

    print("KERNEL_OK")
</pallas_src>

<mosaic_0001>
module attributes {stable_mosaic.version = 11 : i64} {
  func.func @_pair_bias_attn_kernel(%arg0: i32, %arg1: i32, %arg2: memref<1x8x32xf32, #tpu.memory_space<vmem>>, %arg3: memref<1x8x32xf32, #tpu.memory_space<vmem>>, %arg4: memref<1x8x8x16xf32, #tpu.memory_space<vmem>>, %arg5: memref<1x32xf32, #tpu.memory_space<vmem>>, %arg6: memref<1x32xf32, #tpu.memory_space<vmem>>, %arg7: memref<32x32xf32, #tpu.memory_space<vmem>>, %arg8: memref<32x64xf32, #tpu.memory_space<vmem>>, %arg9: memref<32x32xf32, #tpu.memory_space<vmem>>, %arg10: memref<1x32xf32, #tpu.memory_space<vmem>>, %arg11: memref<1x16xf32, #tpu.memory_space<vmem>>, %arg12: memref<1x16xf32, #tpu.memory_space<vmem>>, %arg13: memref<4x16xf32, #tpu.memory_space<vmem>>, %arg14: memref<1x8x32xf32, #tpu.memory_space<vmem>>, %arg15: memref<4x8x8xf32, #tpu.memory_space<vmem>>, %arg16: memref<4x8x8xf32, #tpu.memory_space<vmem>>) attributes {dimension_semantics = [#tpu.dimension_semantics<parallel>, #tpu.dimension_semantics<arbitrary>], iteration_bounds = array<i64: 2, 1>, scalar_prefetch = 0 : i64, scratch_operands = 2 : i64, tpu.core_type = #tpu.core_type<tc>, window_params = [{transform_indices = @transform_0, window_bounds = array<i64: 1, 8, 32>}, {transform_indices = @transform_1, window_bounds = array<i64: 1, 8, 32>}, {transform_indices = @transform_2, window_bounds = array<i64: 1, 8, 8, 16>}, {pipeline_mode = #tpu.pipeline_mode<synchronous>, transform_indices = @transform_3, window_bounds = array<i64: 1, 32>}, {pipeline_mode = #tpu.pipeline_mode<synchronous>, transform_indices = @transform_4, window_bounds = array<i64: 1, 32>}, {pipeline_mode = #tpu.pipeline_mode<synchronous>, transform_indices = @transform_5, window_bounds = array<i64: 32, 32>}, {pipeline_mode = #tpu.pipeline_mode<synchronous>, transform_indices = @transform_6, window_bounds = array<i64: 32, 64>}, {pipeline_mode = #tpu.pipeline_mode<synchronous>, transform_indices = @transform_7, window_bounds = array<i64: 32, 32>}, {pipeline_mode = #tpu.pipeline_mode<synchronous>, transform_indices = @transform_8, window_bounds = array<i64: 1, 32>}, {pipeline_mode = #tpu.pipeline_mode<synchronous>, transform_indices = @transform_9, window_bounds = array<i64: 1, 16>}, {pipeline_mode = #tpu.pipeline_mode<synchronous>, transform_indices = @transform_10, window_bounds = array<i64: 1, 16>}, {pipeline_mode = #tpu.pipeline_mode<synchronous>, transform_indices = @transform_11, window_bounds = array<i64: 4, 16>}, {transform_indices = @transform_12, window_bounds = array<i64: 1, 8, 32>}]} {
    %c0_i32 = arith.constant 0 : i32
    %0 = arith.cmpi eq, %arg1, %c0_i32 : i32
    %1 = arith.extui %0 : i1 to i32
    %c0_i32_0 = arith.constant 0 : i32
    %2 = arith.cmpi ne, %1, %c0_i32_0 : i32
    scf.if %2 {
      %c0_49 = arith.constant 0 : index
      %c0_50 = arith.constant 0 : index
      %c0_51 = arith.constant 0 : index
      %100 = vector.load %arg3[%c0_49, %c0_50, %c0_51] : memref<1x8x32xf32, #tpu.memory_space<vmem>>, vector<1x8x32xf32>
      %101 = vector.shape_cast %100 : vector<1x8x32xf32> to vector<8x32xf32>
      %c0_52 = arith.constant 0 : index
      %c0_53 = arith.constant 0 : index
      %102 = vector.load %arg5[%c0_52, %c0_53] : memref<1x32xf32, #tpu.memory_space<vmem>>, vector<1x32xf32>
      %103 = vector.shape_cast %102 : vector<1x32xf32> to vector<32xf32>
      %c0_54 = arith.constant 0 : index
      %c0_55 = arith.constant 0 : index
      %104 = vector.load %arg6[%c0_54, %c0_55] : memref<1x32xf32, #tpu.memory_space<vmem>>, vector<1x32xf32>
      %105 = vector.shape_cast %104 : vector<1x32xf32> to vector<32xf32>
      %cst_56 = arith.constant dense<0.000000e+00> : vector<8xf32>
      %106 = vector.multi_reduction <add>, %101, %cst_56 [1] : vector<8x32xf32> to vector<8xf32>
      %107 = vector.shape_cast %106 : vector<8xf32> to vector<8x1xf32>
      %cst_57 = arith.constant 3.200000e+01 : f32
      %108 = vector.broadcast %cst_57 : f32 to vector<8x1xf32>
      %109 = arith.divf %107, %108 : vector<8x1xf32>
      %110 = vector.broadcast %109 : vector<8x1xf32> to vector<8x32xf32>
      %111 = arith.subf %101, %110 : vector<8x32xf32>
      %112 = arith.mulf %111, %111 : vector<8x32xf32>
      %cst_58 = arith.constant dense<0.000000e+00> : vector<8xf32>
      %113 = vector.multi_reduction <add>, %112, %cst_58 [1] : vector<8x32xf32> to vector<8xf32>
      %114 = vector.shape_cast %113 : vector<8xf32> to vector<8x1xf32>
      %cst_59 = arith.constant 3.200000e+01 : f32
      %115 = vector.broadcast %cst_59 : f32 to vector<8x1xf32>
      %116 = arith.divf %114, %115 : vector<8x1xf32>
      %117 = vector.broadcast %109 : vector<8x1xf32> to vector<8x32xf32>
      %118 = arith.subf %101, %117 : vector<8x32xf32>
      %cst_60 = arith.constant 9.99999974E-6 : f32
      %119 = vector.broadcast %cst_60 : f32 to vector<8x1xf32>
      %120 = arith.addf %116, %119 : vector<8x1xf32>
      %121 = math.rsqrt %120 : vector<8x1xf32>
      %122 = vector.broadcast %121 : vector<8x1xf32> to vector<8x32xf32>
      %123 = arith.mulf %118, %122 : vector<8x32xf32>
      %124 = vector.shape_cast %103 : vector<32xf32> to vector<1x32xf32>
      %125 = vector.broadcast %124 : vector<1x32xf32> to vector<8x32xf32>
      %126 = arith.mulf %123, %125 : vector<8x32xf32>
      %127 = vector.shape_cast %105 : vector<32xf32> to vector<1x32xf32>
      %128 = vector.broadcast %127 : vector<1x32xf32> to vector<8x32xf32>
      %129 = arith.addf %126, %128 : vector<8x32xf32>
      %c0_61 = arith.constant 0 : index
      %c0_62 = arith.constant 0 : index
      %130 = vector.load %arg8[%c0_61, %c0_62] : memref<32x64xf32, #tpu.memory_space<vmem>>, vector<32x64xf32>
      %cst_63 = arith.constant dense<0.000000e+00> : vector<8x64xf32>
      %131 = tpu.matmul %129, %130, %cst_63 {dimension_numbers = #tpu.dot_dimension_numbers<[1], [0], [0], [1], [0, 0, 1, 1], [], []>} : vector<8x32xf32>, vector<32x64xf32>, vector<8x64xf32> -> vector<8x64xf32>
      %132 = vector.extract_strided_slice %131 {offsets = [0, 0], sizes = [8, 32], strides = [1, 1]} : vector<8x64xf32> to vector<8x32xf32>
      %133 = vector.shape_cast %132 : vector<8x32xf32> to vector<8x4x8xf32>
      %134 = tpu.transpose %133, [1, 0, 2] : vector<8x4x8xf32> -> vector<4x8x8xf32>
      %c0_64 = arith.constant 0 : index
      %c0_65 = arith.constant 0 : index
      %c0_66 = arith.constant 0 : index
      %135 = vector.load %arg15[%c0_64, %c0_65, %c0_66] : memref<4x8x8xf32, #tpu.memory_space<vmem>>, vector<4x8x8xf32>
      tpu.vector_store %arg15[%c0_64, %c0_65, %c0_66], %134 {strides = array<i32>} : memref<4x8x8xf32, #tpu.memory_space<vmem>>, vector<4x8x8xf32>,
      %136 = vector.extract_strided_slice %131 {offsets = [0, 32], sizes = [8, 32], strides = [1, 1]} : vector<8x64xf32> to vector<8x32xf32>
      %137 = vector.shape_cast %136 : vector<8x32xf32> to vector<8x4x8xf32>
      %138 = tpu.transpose %137, [1, 0, 2] : vector<8x4x8xf32> -> vector<4x8x8xf32>
      %c0_67 = arith.constant 0 : index
      %c0_68 = arith.constant 0 : index
      %c0_69 = arith.constant 0 : index
      %139 = vector.load %arg16[%c0_67, %c0_68, %c0_69] : memref<4x8x8xf32, #tpu.memory_space<vmem>>, vector<4x8x8xf32>
      tpu.vector_store %arg16[%c0_67, %c0_68, %c0_69], %138 {strides = array<i32>} : memref<4x8x8xf32, #tpu.memory_space<vmem>>, vector<4x8x8xf32>,
    } else {
    }
    %c0 = arith.constant 0 : index
    %c0_1 = arith.constant 0 : index
    %c0_2 = arith.constant 0 : index
    %3 = vector.load %arg2[%c0, %c0_1, %c0_2] : memref<1x8x32xf32, #tpu.memory_space<vmem>>, vector<1x8x32xf32>
    %4 = vector.shape_cast %3 : vector<1x8x32xf32> to vector<8x32xf32>
    %c0_3 = arith.constant 0 : index
    %c0_4 = arith.constant 0 : index
    %5 = vector.load %arg5[%c0_3, %c0_4] : memref<1x32xf32, #tpu.memory_space<vmem>>, vector<1x32xf32>
    %6 = vector.shape_cast %5 : vector<1x32xf32> to vector<32xf32>
    %c0_5 = arith.constant 0 : index
    %c0_6 = arith.constant 0 : index
    %7 = vector.load %arg6[%c0_5, %c0_6] : memref<1x32xf32, #tpu.memory_space<vmem>>, vector<1x32xf32>
    %8 = vector.shape_cast %7 : vector<1x32xf32> to vector<32xf32>
    %cst = arith.constant dense<0.000000e+00> : vector<8xf32>
    %9 = vector.multi_reduction <add>, %4, %cst [1] : vector<8x32xf32> to vector<8xf32>
    %10 = vector.shape_cast %9 : vector<8xf32> to vector<8x1xf32>
    %cst_7 = arith.constant 3.200000e+01 : f32
    %11 = vector.broadcast %cst_7 : f32 to vector<8x1xf32>
    %12 = arith.divf %10, %11 : vector<8x1xf32>
    %13 = vector.broadcast %12 : vector<8x1xf32> to vector<8x32xf32>
    %14 = arith.subf %4, %13 : vector<8x32xf32>
    %15 = arith.mulf %14, %14 : vector<8x32xf32>
    %cst_8 = arith.constant dense<0.000000e+00> : vector<8xf32>
    %16 = vector.multi_reduction <add>, %15, %cst_8 [1] : vector<8x32xf32> to vector<8xf32>
    %17 = vector.shape_cast %16 : vector<8xf32> to vector<8x1xf32>
    %cst_9 = arith.constant 3.200000e+01 : f32
    %18 = vector.broadcast %cst_9 : f32 to vector<8x1xf32>
    %19 = arith.divf %17, %18 : vector<8x1xf32>
    %20 = vector.broadcast %12 : vector<8x1xf32> to vector<8x32xf32>
    %21 = arith.subf %4, %20 : vector<8x32xf32>
    %cst_10 = arith.constant 9.99999974E-6 : f32
    %22 = vector.broadcast %cst_10 : f32 to vector<8x1xf32>
    %23 = arith.addf %19, %22 : vector<8x1xf32>
    %24 = math.rsqrt %23 : vector<8x1xf32>
    %25 = vector.broadcast %24 : vector<8x1xf32> to vector<8x32xf32>
    %26 = arith.mulf %21, %25 : vector<8x32xf32>
    %27 = vector.shape_cast %6 : vector<32xf32> to vector<1x32xf32>
    %28 = vector.broadcast %27 : vector<1x32xf32> to vector<8x32xf32>
    %29 = arith.mulf %26, %28 : vector<8x32xf32>
    %30 = vector.shape_cast %8 : vector<32xf32> to vector<1x32xf32>
    %31 = vector.broadcast %30 : vector<1x32xf32> to vector<8x32xf32>
    %32 = arith.addf %29, %31 : vector<8x32xf32>
    %c0_11 = arith.constant 0 : index
    %c0_12 = arith.constant 0 : index
    %33 = vector.load %arg7[%c0_11, %c0_12] : memref<32x32xf32, #tpu.memory_space<vmem>>, vector<32x32xf32>
    %cst_13 = arith.constant dense<0.000000e+00> : vector<8x32xf32>
    %34 = tpu.matmul %32, %33, %cst_13 {dimension_numbers = #tpu.dot_dimension_numbers<[1], [0], [0], [1], [0, 0, 1, 1], [], []>} : vector<8x32xf32>, vector<32x32xf32>, vector<8x32xf32> -> vector<8x32xf32>
    %cst_14 = arith.constant 0.353553385 : f32
    %35 = vector.broadcast %cst_14 : f32 to vector<8x32xf32>
    %36 = arith.mulf %34, %35 : vector<8x32xf32>
    %37 = vector.shape_cast %36 : vector<8x32xf32> to vector<8x4x8xf32>
    %38 = tpu.transpose %37, [1, 0, 2] : vector<8x4x8xf32> -> vector<4x8x8xf32>
    %c0_15 = arith.constant 0 : index
    %c0_16 = arith.constant 0 : index
    %c0_17 = arith.constant 0 : index
    %39 = vector.load %arg15[%c0_15, %c0_16, %c0_17] : memref<4x8x8xf32, #tpu.memory_space<vmem>>, vector<4x8x8xf32>
    %c0_18 = arith.constant 0 : index
    %c0_19 = arith.constant 0 : index
    %c0_20 = arith.constant 0 : index
    %40 = vector.load %arg16[%c0_18, %c0_19, %c0_20] : memref<4x8x8xf32, #tpu.memory_space<vmem>>, vector<4x8x8xf32>
    "tpu.trace_start"() <{level = 10 : i32, message = "htd,hsd->hts"}> : () -> ()
    %cst_21 = arith.constant dense<0.000000e+00> : vector<4x8x8xf32>
    %41 = tpu.matmul %38, %39, %cst_21 {dimension_numbers = #tpu.dot_dimension_numbers<[2], [2], [1], [1], [0, 0, 0, 1, 1, 1], [0], [0]>} : vector<4x8x8xf32>, vector<4x8x8xf32>, vector<4x8x8xf32> -> vector<4x8x8xf32>
    "tpu.trace_stop"() : () -> ()
    %c0_22 = arith.constant 0 : index
    %c0_23 = arith.constant 0 : index
    %c0_24 = arith.constant 0 : index
    %c0_25 = arith.constant 0 : index
    %42 = vector.load %arg4[%c0_22, %c0_23, %c0_24, %c0_25] : memref<1x8x8x16xf32, #tpu.memory_space<vmem>>, vector<1x8x8x16xf32>
    %43 = vector.shape_cast %42 : vector<1x8x8x16xf32> to vector<8x8x16xf32>
    %c0_26 = arith.constant 0 : index
    %c0_27 = arith.constant 0 : index
    %44 = vector.load %arg11[%c0_26, %c0_27] : memref<1x16xf32, #tpu.memory_space<vmem>>, vector<1x16xf32>
    %45 = vector.shape_cast %44 : vector<1x16xf32> to vector<16xf32>
    %c0_28 = arith.constant 0 : index
    %c0_29 = arith.constant 0 : index
    %46 = vector.load %arg12[%c0_28, %c0_29] : memref<1x16xf32, #tpu.memory_space<vmem>>, vector<1x16xf32>
    %47 = vector.shape_cast %46 : vector<1x16xf32> to vector<16xf32>
    %cst_30 = arith.constant dense<0.000000e+00> : vector<8x8xf32>
    %48 = vector.multi_reduction <add>, %43, %cst_30 [2] : vector<8x8x16xf32> to vector<8x8xf32>
    %49 = vector.shape_cast %48 : vector<8x8xf32> to vector<8x8x1xf32>
    %cst_31 = arith.constant 1.600000e+01 : f32
    %50 = vector.broadcast %cst_31 : f32 to vector<8x8x1xf32>
    %51 = arith.divf %49, %50 : vector<8x8x1xf32>
    %52 = vector.broadcast %51 : vector<8x8x1xf32> to vector<8x8x16xf32>
    %53 = arith.subf %43, %52 : vector<8x8x16xf32>
    %54 = arith.mulf %53, %53 : vector<8x8x16xf32>
    %cst_32 = arith.constant dense<0.000000e+00> : vector<8x8xf32>
    %55 = vector.multi_reduction <add>, %54, %cst_32 [2] : vector<8x8x16xf32> to vector<8x8xf32>
    %56 = vector.shape_cast %55 : vector<8x8xf32> to vector<8x8x1xf32>
    %cst_33 = arith.constant 1.600000e+01 : f32
    %57 = vector.broadcast %cst_33 : f32 to vector<8x8x1xf32>
    %58 = arith.divf %56, %57 : vector<8x8x1xf32>
    %59 = vector.broadcast %51 : vector<8x8x1xf32> to vector<8x8x16xf32>
    %60 = arith.subf %43, %59 : vector<8x8x16xf32>
    %cst_34 = arith.constant 9.99999974E-6 : f32
    %61 = vector.broadcast %cst_34 : f32 to vector<8x8x1xf32>
    %62 = arith.addf %58, %61 : vector<8x8x1xf32>
    %63 = math.rsqrt %62 : vector<8x8x1xf32>
    %64 = vector.broadcast %63 : vector<8x8x1xf32> to vector<8x8x16xf32>
    %65 = arith.mulf %60, %64 : vector<8x8x16xf32>
    %66 = vector.shape_cast %45 : vector<16xf32> to vector<1x1x16xf32>
    %67 = vector.broadcast %66 : vector<1x1x16xf32> to vector<8x8x16xf32>
    %68 = arith.mulf %65, %67 : vector<8x8x16xf32>
    %69 = vector.shape_cast %47 : vector<16xf32> to vector<1x1x16xf32>
    %70 = vector.broadcast %69 : vector<1x1x16xf32> to vector<8x8x16xf32>
    %71 = arith.addf %68, %70 : vector<8x8x16xf32>
    %c0_35 = arith.constant 0 : index
    %c0_36 = arith.constant 0 : index
    %72 = vector.load %arg13[%c0_35, %c0_36] : memref<4x16xf32, #tpu.memory_space<vmem>>, vector<4x16xf32>
    %73 = vector.shape_cast %71 : vector<8x8x16xf32> to vector<64x16xf32>
    %cst_37 = arith.constant dense<0.000000e+00> : vector<4x64xf32>
    %74 = tpu.matmul %72, %73, %cst_37 {dimension_numbers = #tpu.dot_dimension_numbers<[1], [1], [0], [0], [0, 0, 1, 0], [], []>} : vector<4x16xf32>, vector<64x16xf32>, vector<4x64xf32> -> vector<4x64xf32>
    %75 = vector.shape_cast %74 : vector<4x64xf32> to vector<4x8x8xf32>
    %76 = arith.addf %41, %75 : vector<4x8x8xf32>
    %cst_38 = arith.constant dense<0xFF800000> : vector<4x8xf32>
    %77 = vector.multi_reduction <maximumf>, %76, %cst_38 [2] : vector<4x8x8xf32> to vector<4x8xf32>
    %78 = vector.shape_cast %77 : vector<4x8xf32> to vector<4x8x1xf32>
    %79 = vector.broadcast %78 : vector<4x8x1xf32> to vector<4x8x8xf32>
    %80 = arith.subf %76, %79 : vector<4x8x8xf32>
    %81 = math.exp %80 : vector<4x8x8xf32>
    %cst_39 = arith.constant dense<0.000000e+00> : vector<4x8xf32>
    %82 = vector.multi_reduction <add>, %81, %cst_39 [2] : vector<4x8x8xf32> to vector<4x8xf32>
    %83 = vector.shape_cast %82 : vector<4x8xf32> to vector<4x8x1xf32>
    "tpu.trace_start"() <{level = 10 : i32, message = "hts,hsd->htd"}> : () -> ()
    %cst_40 = arith.constant dense<0.000000e+00> : vector<4x8x8xf32>
    %84 = tpu.matmul %81, %40, %cst_40 {dimension_numbers = #tpu.dot_dimension_numbers<[2], [1], [1], [2], [0, 0, 0, 1, 1, 2], [0], [0]>} : vector<4x8x8xf32>, vector<4x8x8xf32>, vector<4x8x8xf32> -> vector<4x8x8xf32>
    "tpu.trace_stop"() : () -> ()
    %85 = tpu.reciprocal %83 : vector<4x8x1xf32> -> vector<4x8x1xf32>
    %86 = vector.broadcast %85 : vector<4x8x1xf32> to vector<4x8x8xf32>
    %87 = arith.mulf %84, %86 : vector<4x8x8xf32>
    %88 = tpu.transpose %87, [1, 0, 2] : vector<4x8x8xf32> -> vector<8x4x8xf32>
    %89 = vector.shape_cast %88 : vector<8x4x8xf32> to vector<8x32xf32>
    %c0_41 = arith.constant 0 : index
    %c0_42 = arith.constant 0 : index
    %90 = vector.load %arg9[%c0_41, %c0_42] : memref<32x32xf32, #tpu.memory_space<vmem>>, vector<32x32xf32>
    %cst_43 = arith.constant dense<0.000000e+00> : vector<8x32xf32>
    %91 = tpu.matmul %89, %90, %cst_43 {dimension_numbers = #tpu.dot_dimension_numbers<[1], [0], [0], [1], [0, 0, 1, 1], [], []>} : vector<8x32xf32>, vector<32x32xf32>, vector<8x32xf32> -> vector<8x32xf32>
    %c0_44 = arith.constant 0 : index
    %c0_45 = arith.constant 0 : index
    %92 = vector.load %arg10[%c0_44, %c0_45] : memref<1x32xf32, #tpu.memory_space<vmem>>, vector<1x32xf32>
    %93 = vector.shape_cast %92 : vector<1x32xf32> to vector<32xf32>
    %94 = vector.shape_cast %93 : vector<32xf32> to vector<1x32xf32>
    %95 = vector.broadcast %94 : vector<1x32xf32> to vector<8x32xf32>
    %96 = arith.addf %91, %95 : vector<8x32xf32>
    %c0_46 = arith.constant 0 : index
    %c0_47 = arith.constant 0 : index
    %c0_48 = arith.constant 0 : index
    %97 = vector.load %arg14[%c0_46, %c0_47, %c0_48] : memref<1x8x32xf32, #tpu.memory_space<vmem>>, vector<1x8x32xf32>
    %98 = vector.shape_cast %97 : vector<1x8x32xf32> to vector<8x32xf32>
    %99 = vector.shape_cast %96 : vector<8x32xf32> to vector<1x8x32xf32>
    tpu.vector_store %arg14[%c0_46, %c0_47, %c0_48], %99 {strides = array<i32>} : memref<1x8x32xf32, #tpu.memory_space<vmem>>, vector<1x8x32xf32>,
    return
  }
  func.func @transform_0(%arg0: i32, %arg1: i32) -> (i32, i32, i32) {
    %c0_i32 = arith.constant 0 : i32
    %c0_i32_0 = arith.constant 0 : i32
    return %arg0, %arg1, %c0_i32 : i32, i32, i32
  }
  func.func @transform_1(%arg0: i32, %arg1: i32) -> (i32, i32, i32) {
    %c0_i32 = arith.constant 0 : i32
    %c0_i32_0 = arith.constant 0 : i32
    %c0_i32_1 = arith.constant 0 : i32
    return %arg0, %c0_i32, %c0_i32_0 : i32, i32, i32
  }
  func.func @transform_2(%arg0: i32, %arg1: i32) -> (i32, i32, i32, i32) {
    %c0_i32 = arith.constant 0 : i32
    %c0_i32_0 = arith.constant 0 : i32
    %c0_i32_1 = arith.constant 0 : i32
    return %arg0, %arg1, %c0_i32, %c0_i32_0 : i32, i32, i32, i32
  }
  func.func @transform_3(%arg0: i32, %arg1: i32) -> (i32, i32) {
    %c0_i32 = arith.constant 0 : i32
    %c0_i32_0 = arith.constant 0 : i32
    %c0_i32_1 = arith.constant 0 : i32
    return %c0_i32, %c0_i32_0 : i32, i32
  }
  func.func @transform_4(%arg0: i32, %arg1: i32) -> (i32, i32) {
    %c0_i32 = arith.constant 0 : i32
    %c0_i32_0 = arith.constant 0 : i32
    %c0_i32_1 = arith.constant 0 : i32
    return %c0_i32, %c0_i32_0 : i32, i32
  }
  func.func @transform_5(%arg0: i32, %arg1: i32) -> (i32, i32) {
    %c0_i32 = arith.constant 0 : i32
    %c0_i32_0 = arith.constant 0 : i32
    %c0_i32_1 = arith.constant 0 : i32
    return %c0_i32, %c0_i32_0 : i32, i32
  }
  func.func @transform_6(%arg0: i32, %arg1: i32) -> (i32, i32) {
    %c0_i32 = arith.constant 0 : i32
    %c0_i32_0 = arith.constant 0 : i32
    %c0_i32_1 = arith.constant 0 : i32
    return %c0_i32, %c0_i32_0 : i32, i32
  }
  func.func @transform_7(%arg0: i32, %arg1: i32) -> (i32, i32) {
    %c0_i32 = arith.constant 0 : i32
    %c0_i32_0 = arith.constant 0 : i32
    %c0_i32_1 = arith.constant 0 : i32
    return %c0_i32, %c0_i32_0 : i32, i32
  }
  func.func @transform_8(%arg0: i32, %arg1: i32) -> (i32, i32) {
    %c0_i32 = arith.constant 0 : i32
    %c0_i32_0 = arith.constant 0 : i32
    %c0_i32_1 = arith.constant 0 : i32
    return %c0_i32, %c0_i32_0 : i32, i32
  }
  func.func @transform_9(%arg0: i32, %arg1: i32) -> (i32, i32) {
    %c0_i32 = arith.constant 0 : i32
    %c0_i32_0 = arith.constant 0 : i32
    %c0_i32_1 = arith.constant 0 : i32
    return %c0_i32, %c0_i32_0 : i32, i32
  }
  func.func @transform_10(%arg0: i32, %arg1: i32) -> (i32, i32) {
    %c0_i32 = arith.constant 0 : i32
    %c0_i32_0 = arith.constant 0 : i32
    %c0_i32_1 = arith.constant 0 : i32
    return %c0_i32, %c0_i32_0 : i32, i32
  }
  func.func @transform_11(%arg0: i32, %arg1: i32) -> (i32, i32) {
    %c0_i32 = arith.constant 0 : i32
    %c0_i32_0 = arith.constant 0 : i32
    %c0_i32_1 = arith.constant 0 : i32
    return %c0_i32, %c0_i32_0 : i32, i32
  }
  func.func @transform_12(%arg0: i32, %arg1: i32) -> (i32, i32, i32) {
    %c0_i32 = arith.constant 0 : i32
    %c0_i32_0 = arith.constant 0 : i32
    return %arg0, %arg1, %c0_i32 : i32, i32, i32
  }
}

</mosaic_0001>

<llo_original>
// kernel: tpu_custom_call.1
$region0: #{tpu_custom_call.1}
  #allocation0 [shape = 'u32[]', space=smem, size = 0x4, offset = 0x4, fixed_abs, tag = 'smem constant byte address 0x4 - core index']
  #allocation1 [shape = 'u32[144,128]{1,0:T(1,128)}', space=vmem, size = 0x12000, scoped, tag = 'internal scratch']
  #allocation2 [shape = 'f32[4,8,8]{2,1,0:T(8,128)}', space=vmem, size = 0x4000, scoped, tag = 'scratch operand']
  #allocation3 [shape = 'f32[4,8,8]{2,1,0:T(8,128)}', space=vmem, size = 0x4000, scoped, tag = 'scratch operand']
  %s0 = inlined_call_operand.hbm [shape: f32[2,8,32], index: 0, kind: input, shape index: {}]
  %s1 = inlined_call_operand.hbm [shape: f32[2,8,32], index: 1, kind: input, shape index: {}]
  %s2 = inlined_call_operand.hbm [shape: f32[2,8,8,16], index: 2, kind: input, shape index: {}]
  %s3 = inlined_call_operand.vmem [shape: f32[1,32], index: 3, kind: input, shape index: {}]
  %s4 = inlined_call_operand.vmem [shape: f32[1,32], index: 4, kind: input, shape index: {}]
  %s5 = inlined_call_operand.hbm [shape: f32[32,32], index: 5, kind: input, shape index: {}]
  %s6 = inlined_call_operand.hbm [shape: f32[32,64], index: 6, kind: input, shape index: {}]
  %s7 = inlined_call_operand.hbm [shape: f32[32,32], index: 7, kind: input, shape index: {}]
  %s8 = inlined_call_operand.vmem [shape: f32[1,32], index: 8, kind: input, shape index: {}]
  %s9 = inlined_call_operand.vmem [shape: f32[1,16], index: 9, kind: input, shape index: {}]
  %s10 = inlined_call_operand.vmem [shape: f32[1,16], index: 10, kind: input, shape index: {}]
  %s11 = inlined_call_operand.vmem [shape: f32[4,16], index: 11, kind: input, shape index: {}]
  %s12 = inlined_call_operand.hbm [shape: f32[2,8,32], index: 12, kind: output, shape index: {}]
  %s13 = sld [smem:[#allocation0]]
  $region109: #{tpu_custom_call.1} parent=0
    _
  %s15 = ssub.s32 1, %s13
  %s16 = scalar_select 0, %s15, %s13
  $region1: #{tpu_custom_call.1} parent=0
    #allocation4 [shape = 'u8[8192]{0}', space=vmem, size = 0x2000, scoped, tag = 'input window, operand 0']
    #allocation5 [shape = 's32[2]{0}', space=sflag, size = 0x8, scoped, tag = 'scoped memory for tpu_custom_call.1']
    #allocation6 [shape = 's32[2]{0}', space=sflag, size = 0x8, scoped, tag = 'scoped memory for tpu_custom_call.1']
    #allocation7 [shape = 'u8[8192]{0}', space=vmem, size = 0x2000, scoped, tag = 'input window, operand 1']
    #allocation8 [shape = 's32[2]{0}', space=sflag, size = 0x8, scoped, tag = 'scoped memory for tpu_custom_call.1']
    #allocation9 [shape = 'u8[65536]{0}', space=vmem, size = 0x10000, scoped, tag = 'input window, operand 2']
    #allocation10 [shape = 'u8[16384]{0}', space=vmem, size = 0x4000, scoped, tag = 'input window, operand 5, single buffered']
    #allocation11 [shape = 's32[1]{0}', space=sflag, size = 0x4, scoped, tag = 'scoped memory for tpu_custom_call.1']
    #allocation12 [shape = 'u8[16384]{0}', space=vmem, size = 0x4000, scoped, tag = 'input window, operand 6, single buffered']
    #allocation13 [shape = 'u8[16384]{0}', space=vmem, size = 0x4000, scoped, tag = 'input window, operand 7, single buffered']
    #allocation14 [shape = 's32[1]{0}', space=sflag, size = 0x4, scoped, tag = 'scoped memory for tpu_custom_call.1']
    #allocation15 [shape = 'u8[8192]{0}', space=vmem, size = 0x2000, scoped, tag = 'output window, operand 0']
    %17 = vsyncpa [#allocation5], 0
    %s18 = scalar_lea.sflag [#allocation5], 1
    %19 = vsyncpa %s18, 0
    %20 = vsyncpa [#allocation8], 0
    %s21 = scalar_lea.sflag [#allocation8], 1
    %22 = vsyncpa %s21, 0
    %23 = vsyncpa [#allocation11], 0
    %24 = vsyncpa [#allocation14], 0
    %25 = vsyncpa [#allocation6], 0
    %s26 = scalar_lea.sflag [#allocation6], 1
    %27 = vsyncpa %s26, 0
    loop: start=0, step=1, limit=4
    $region2: #{tpu_custom_call.1} parent=1 // loop_pre_header
      _
    $region3: #{tpu_custom_call.1} parent=1 // loop_header
      %s29 = sphi 0, %s33
      %p30 = scmp.ge.s32.totalorder %s29, 4
      %s36 = sphi 0, %s48
      %s37 = sphi 0, %s44
      %s38 = sphi 0, %s36
      %s39 = sphi 0, %s37
      %s40 = sphi 0, %s38
      %s41 = sphi 0, %s39
      %s53 = sphi 0, %s55
      %s56 = sphi 0, %s53
      %s57 = sphi 0, %s56
      %s73 = sphi 0, %s57
      %s79 = sphi 0, %s81
      %s82 = sphi 0, %s79
      %s83 = sphi 0, %s82
      %s99 = sphi 0, %s83
      %s107 = sphi 0, %s109
      %s110 = sphi 0, %s107
      %s111 = sphi 0, %s110
      %s127 = sphi 0, %s111
      %s131 = sphi 0, %s131
      %s133 = sphi 0, %s131
      %s134 = sphi 0, %s133
      %s148 = sphi 0, %s134
      %s152 = sphi 0, %s152
      %s154 = sphi 0, %s152
      %s155 = sphi 0, %s154
      %s169 = sphi 0, %s155
      %s173 = sphi 0, %s173
      %s175 = sphi 0, %s173
      %s176 = sphi 0, %s175
      %s190 = sphi 0, %s176
      %s194 = sphi 0, %s194
      %s196 = sphi 0, %s194
      %s197 = sphi 0, %s196
      %s211 = sphi 0, %s197
      %s215 = sphi 0, %s215
      %s217 = sphi 0, %s215
      %s218 = sphi 0, %s217
      %s232 = sphi 0, %s218
      %s236 = sphi 0, %s236
      %s238 = sphi 0, %s236
      %s239 = sphi 0, %s238
      %s253 = sphi 0, %s239
      %s257 = sphi 0, %s257
      %s259 = sphi 0, %s257
      %s260 = sphi 0, %s259
      %s274 = sphi 0, %s260
      %s278 = sphi 0, %s278
      %s280 = sphi 0, %s278
      %s281 = sphi 0, %s280
      %s295 = sphi 0, %s281
      %s299 = sphi 0, %s299
      %s301 = sphi 0, %s299
      %s302 = sphi 0, %s301
      %s316 = sphi 0, %s302
      %s324 = sphi 0, %s326
      %s327 = sphi 0, %s324
      %s328 = sphi 0, %s327
      %s344 = sphi 0, %s328
    $region4: #{tpu_custom_call.1} parent=1 // loop_header_branch
      %32 = sbr.rel (%p30) target = $region8
    $region5: #{tpu_custom_call.1} parent=1 // loop_body
      %s34 = ssub.s32 %s29, 1
      %s35 = ssub.s32 %s29, 2
      %s42 = sadd.s32 1, %s37
      %p43 = scmp.ge.s32.totalorder %s42, 1
      %s44 = scalar_select %p43, 0, %s42
      %s45 = sadd.s32 1, %s36
      %s46 = scalar_select %p43, %s45, %s36
      %p47 = scmp.ge.s32.totalorder %s46, 2
      %s48 = scalar_select %p47, 0, %s46
      %s49 = ssub.s32 %s36, %s48
      %s50 = ssub.s32 %s37, %s44
      %s51 = sor.u32 %s49, %s50
      %p52 = scmp.eq.s32.totalorder %s51, 0
      %s54 = sadd.s32 %s53, 1
      %s55 = scalar_select %p52, %s53, %s54
      %p58 = pneg %p52
      %p59 = scmp.eq.s32.totalorder %s29, 1
      %p60 = por %p58, %p59
      %p61 = scmp.ne.s32.totalorder %s53, %s56
      %p62 = scmp.eq.s32.totalorder %s29, 0
      %p63 = por %p61, %p62
      %p64 = scmp.ne.s32.totalorder %s53, %s56
      %p65 = scmp.eq.s32.totalorder %s34, 1
      %p66 = por %p64, %p65
      %p67 = scmp.ne.s32.totalorder %s56, %s57
      %p68 = scmp.eq.s32.totalorder %s34, 0
      %p69 = por %p67, %p68
      %p70 = scmp.ne.s32.totalorder %s56, %s57
      %p71 = scmp.eq.s32.totalorder %s35, 1
      %p72 = por %p70, %p71
      %p74 = scmp.ne.s32.totalorder %s57, %s73
      %p75 = scmp.eq.s32.totalorder %s35, 0
      %p76 = por %p74, %p75
      %s77 = ssub.s32 %s36, %s48
      %p78 = scmp.eq.s32.totalorder %s77, 0
      %s80 = sadd.s32 %s79, 1
      %s81 = scalar_select %p78, %s79, %s80
      %p84 = pneg %p78
      %p85 = scmp.eq.s32.totalorder %s29, 1
      %p86 = por %p84, %p85
      %p87 = scmp.ne.s32.totalorder %s79, %s82
      %p88 = scmp.eq.s32.totalorder %s29, 0
      %p89 = por %p87, %p88
      %p90 = scmp.ne.s32.totalorder %s79, %s82
      %p91 = scmp.eq.s32.totalorder %s34, 1
      %p92 = por %p90, %p91
      %p93 = scmp.ne.s32.totalorder %s82, %s83
      %p94 = scmp.eq.s32.totalorder %s34, 0
      %p95 = por %p93, %p94
      %p96 = scmp.ne.s32.totalorder %s82, %s83
      %p97 = scmp.eq.s32.totalorder %s35, 1
      %p98 = por %p96, %p97
      %p100 = scmp.ne.s32.totalorder %s83, %s99
      %p101 = scmp.eq.s32.totalorder %s35, 0
      %p102 = por %p100, %p101
      %s103 = ssub.s32 %s36, %s48
      %s104 = ssub.s32 %s37, %s44
      %s105 = sor.u32 %s103, %s104
      %p106 = scmp.eq.s32.totalorder %s105, 0
      %s108 = sadd.s32 %s107, 1
      %s109 = scalar_select %p106, %s107, %s108
      %p112 = pneg %p106
      %p113 = scmp.eq.s32.totalorder %s29, 1
      %p114 = por %p112, %p113
      %p115 = scmp.ne.s32.totalorder %s107, %s110
      %p116 = scmp.eq.s32.totalorder %s29, 0
      %p117 = por %p115, %p116
      %p118 = scmp.ne.s32.totalorder %s107, %s110
      %p119 = scmp.eq.s32.totalorder %s34, 1
      %p120 = por %p118, %p119
      %p121 = scmp.ne.s32.totalorder %s110, %s111
      %p122 = scmp.eq.s32.totalorder %s34, 0
      %p123 = por %p121, %p122
      %p124 = scmp.ne.s32.totalorder %s110, %s111
      %p125 = scmp.eq.s32.totalorder %s35, 1
      %p126 = por %p124, %p125
      %p128 = scmp.ne.s32.totalorder %s111, %s127
      %p129 = scmp.eq.s32.totalorder %s35, 0
      %p130 = por %p128, %p129
      %s132 = sadd.s32 %s131, 1
      %p135 = scmp.eq.s32.totalorder %s29, 1
      %p136 = scmp.ne.s32.totalorder %s131, %s133
      %p137 = scmp.eq.s32.totalorder %s29, 0
      %p138 = por %p136, %p137
      %p139 = scmp.ne.s32.totalorder %s131, %s133
      %p140 = scmp.eq.s32.totalorder %s34, 1
      %p141 = por %p139, %p140
      %p142 = scmp.ne.s32.totalorder %s133, %s134
      %p143 = scmp.eq.s32.totalorder %s34, 0
      %p144 = por %p142, %p143
      %p145 = scmp.ne.s32.totalorder %s133, %s134
      %p146 = scmp.eq.s32.totalorder %s35, 1
      %p147 = por %p145, %p146
      %p149 = scmp.ne.s32.totalorder %s134, %s148
      %p150 = scmp.eq.s32.totalorder %s35, 0
      %p151 = por %p149, %p150
      %s153 = sadd.s32 %s152, 1
      %p156 = scmp.eq.s32.totalorder %s29, 1
      %p157 = scmp.ne.s32.totalorder %s152, %s154
      %p158 = scmp.eq.s32.totalorder %s29, 0
      %p159 = por %p157, %p158
      %p160 = scmp.ne.s32.totalorder %s152, %s154
      %p161 = scmp.eq.s32.totalorder %s34, 1
      %p162 = por %p160, %p161
      %p163 = scmp.ne.s32.totalorder %s154, %s155
      %p164 = scmp.eq.s32.totalorder %s34, 0
      %p165 = por %p163, %p164
      %p166 = scmp.ne.s32.totalorder %s154, %s155
      %p167 = scmp.eq.s32.totalorder %s35, 1
      %p168 = por %p166, %p167
      %p170 = scmp.ne.s32.totalorder %s155, %s169
      %p171 = scmp.eq.s32.totalorder %s35, 0
      %p172 = por %p170, %p171
      %s174 = sadd.s32 %s173, 1
      %p177 = scmp.eq.s32.totalorder %s29, 1
      %p178 = scmp.ne.s32.totalorder %s173, %s175
      %p179 = scmp.eq.s32.totalorder %s29, 0
      %p180 = por %p178, %p179
      %p181 = scmp.ne.s32.totalorder %s173, %s175
      %p182 = scmp.eq.s32.totalorder %s34, 1
      %p183 = por %p181, %p182
      %p184 = scmp.ne.s32.totalorder %s175, %s176
      %p185 = scmp.eq.s32.totalorder %s34, 0
      %p186 = por %p184, %p185
      %p187 = scmp.ne.s32.totalorder %s175, %s176
      %p188 = scmp.eq.s32.totalorder %s35, 1
      %p189 = por %p187, %p188
      %p191 = scmp.ne.s32.totalorder %s176, %s190
      %p192 = scmp.eq.s32.totalorder %s35, 0
      %p193 = por %p191, %p192
      %s195 = sadd.s32 %s194, 1
      %p198 = scmp.eq.s32.totalorder %s29, 1
      %p199 = scmp.ne.s32.totalorder %s194, %s196
      %p200 = scmp.eq.s32.totalorder %s29, 0
      %p201 = por %p199, %p200
      %p202 = scmp.ne.s32.totalorder %s194, %s196
      %p203 = scmp.eq.s32.totalorder %s34, 1
      %p204 = por %p202, %p203
      %p205 = scmp.ne.s32.totalorder %s196, %s197
      %p206 = scmp.eq.s32.totalorder %s34, 0
      %p207 = por %p205, %p206
      %p208 = scmp.ne.s32.totalorder %s196, %s197
      %p209 = scmp.eq.s32.totalorder %s35, 1
      %p210 = por %p208, %p209
      %p212 = scmp.ne.s32.totalorder %s197, %s211
      %p213 = scmp.eq.s32.totalorder %s35, 0
      %p214 = por %p212, %p213
      %s216 = sadd.s32 %s215, 1
      %p219 = scmp.eq.s32.totalorder %s29, 1
      %p220 = scmp.ne.s32.totalorder %s215, %s217
      %p221 = scmp.eq.s32.totalorder %s29, 0
      %p222 = por %p220, %p221
      %p223 = scmp.ne.s32.totalorder %s215, %s217
      %p224 = scmp.eq.s32.totalorder %s34, 1
      %p225 = por %p223, %p224
      %p226 = scmp.ne.s32.totalorder %s217, %s218
      %p227 = scmp.eq.s32.totalorder %s34, 0
      %p228 = por %p226, %p227
      %p229 = scmp.ne.s32.totalorder %s217, %s218
      %p230 = scmp.eq.s32.totalorder %s35, 1
      %p231 = por %p229, %p230
      %p233 = scmp.ne.s32.totalorder %s218, %s232
      %p234 = scmp.eq.s32.totalorder %s35, 0
      %p235 = por %p233, %p234
      %s237 = sadd.s32 %s236, 1
      %p240 = scmp.eq.s32.totalorder %s29, 1
      %p241 = scmp.ne.s32.totalorder %s236, %s238
      %p242 = scmp.eq.s32.totalorder %s29, 0
      %p243 = por %p241, %p242
      %p244 = scmp.ne.s32.totalorder %s236, %s238
      %p245 = scmp.eq.s32.totalorder %s34, 1
      %p246 = por %p244, %p245
      %p247 = scmp.ne.s32.totalorder %s238, %s239
      %p248 = scmp.eq.s32.totalorder %s34, 0
      %p249 = por %p247, %p248
      %p250 = scmp.ne.s32.totalorder %s238, %s239
      %p251 = scmp.eq.s32.totalorder %s35, 1
      %p252 = por %p250, %p251
      %p254 = scmp.ne.s32.totalorder %s239, %s253
      %p255 = scmp.eq.s32.totalorder %s35, 0
      %p256 = por %p254, %p255
      %s258 = sadd.s32 %s257, 1
      %p261 = scmp.eq.s32.totalorder %s29, 1
      %p262 = scmp.ne.s32.totalorder %s257, %s259
      %p263 = scmp.eq.s32.totalorder %s29, 0
      %p264 = por %p262, %p263
      %p265 = scmp.ne.s32.totalorder %s257, %s259
      %p266 = scmp.eq.s32.totalorder %s34, 1
      %p267 = por %p265, %p266
      %p268 = scmp.ne.s32.totalorder %s259, %s260
      %p269 = scmp.eq.s32.totalorder %s34, 0
      %p270 = por %p268, %p269
      %p271 = scmp.ne.s32.totalorder %s259, %s260
      %p272 = scmp.eq.s32.totalorder %s35, 1
      %p273 = por %p271, %p272
      %p275 = scmp.ne.s32.totalorder %s260, %s274
      %p276 = scmp.eq.s32.totalorder %s35, 0
      %p277 = por %p275, %p276
      %s279 = sadd.s32 %s278, 1
      %p282 = scmp.eq.s32.totalorder %s29, 1
      %p283 = scmp.ne.s32.totalorder %s278, %s280
      %p284 = scmp.eq.s32.totalorder %s29, 0
      %p285 = por %p283, %p284
      %p286 = scmp.ne.s32.totalorder %s278, %s280
      %p287 = scmp.eq.s32.totalorder %s34, 1
      %p288 = por %p286, %p287
      %p289 = scmp.ne.s32.totalorder %s280, %s281
      %p290 = scmp.eq.s32.totalorder %s34, 0
      %p291 = por %p289, %p290
      %p292 = scmp.ne.s32.totalorder %s280, %s281
      %p293 = scmp.eq.s32.totalorder %s35, 1
      %p294 = por %p292, %p293
      %p296 = scmp.ne.s32.totalorder %s281, %s295
      %p297 = scmp.eq.s32.totalorder %s35, 0
      %p298 = por %p296, %p297
      %s300 = sadd.s32 %s299, 1
      %p303 = scmp.eq.s32.totalorder %s29, 1
      %p304 = scmp.ne.s32.totalorder %s299, %s301
      %p305 = scmp.eq.s32.totalorder %s29, 0
      %p306 = por %p304, %p305
      %p307 = scmp.ne.s32.totalorder %s299, %s301
      %p308 = scmp.eq.s32.totalorder %s34, 1
      %p309 = por %p307, %p308
      %p310 = scmp.ne.s32.totalorder %s301, %s302
      %p311 = scmp.eq.s32.totalorder %s34, 0
      %p312 = por %p310, %p311
      %p313 = scmp.ne.s32.totalorder %s301, %s302
      %p314 = scmp.eq.s32.totalorder %s35, 1
      %p315 = por %p313, %p314
      %p317 = scmp.ne.s32.totalorder %s302, %s316
      %p318 = scmp.eq.s32.totalorder %s35, 0
      %p319 = por %p317, %p318
      %s320 = ssub.s32 %s36, %s48
      %s321 = ssub.s32 %s37, %s44
      %s322 = sor.u32 %s320, %s321
      %p323 = scmp.eq.s32.totalorder %s322, 0
      %s325 = sadd.s32 %s324, 1
      %s326 = scalar_select %p323, %s324, %s325
      %p329 = pneg %p323
      %p330 = scmp.eq.s32.totalorder %s29, 1
      %p331 = por %p329, %p330
      %p332 = scmp.ne.s32.totalorder %s324, %s327
      %p333 = scmp.eq.s32.totalorder %s29, 0
      %p334 = por %p332, %p333
      %p335 = scmp.ne.s32.totalorder %s324, %s327
      %p336 = scmp.eq.s32.totalorder %s34, 1
      %p337 = por %p335, %p336
      %p338 = scmp.ne.s32.totalorder %s327, %s328
      %p339 = scmp.eq.s32.totalorder %s34, 0
      %p340 = por %p338, %p339
      %p341 = scmp.ne.s32.totalorder %s327, %s328
      %p342 = scmp.eq.s32.totalorder %s35, 1
      %p343 = por %p341, %p342
      %p345 = scmp.ne.s32.totalorder %s328, %s344
      %p346 = scmp.eq.s32.totalorder %s35, 0
      %p347 = por %p345, %p346
      %p348 = scmp.le.s32.totalorder 1, %s29
      %p349 = scmp.lt.s32.totalorder %s29, 3
      %p350 = pnand %p348, %p349
      %p351 = pneg %p350
      // Predicated region
      $region9: #{tpu_custom_call.1} parent=5 // pred_check
        _
      $region10: #{tpu_custom_call.1} parent=5 // pred_check_branch
        %353 = sbr.rel (%p350) target = $region12
      $region11: #{tpu_custom_call.1} parent=5 // pred_region
        %s354 = ssub.s32 %s29, 1
        // Predicated region
        $region13: #{tpu_custom_call.1} parent=11 // pred_check
          %p355 = pneg %p144
        $region14: #{tpu_custom_call.1} parent=11 // pred_check_branch
          %357 = sbr.rel (%p355) target = $region16
        $region15: #{tpu_custom_call.1} parent=11 // pred_region
          _
        $region16: #{tpu_custom_call.1} parent=11 // pred_fallthru
          _
        // Predicated region
        $region17: #{tpu_custom_call.1} parent=11 // pred_check
          %p358 = pneg %p165
        $region18: #{tpu_custom_call.1} parent=11 // pred_check_branch
          %360 = sbr.rel (%p358) target = $region20
        $region19: #{tpu_custom_call.1} parent=11 // pred_region
          _
        $region20: #{tpu_custom_call.1} parent=11 // pred_fallthru
          _
        // Predicated region
        $region21: #{tpu_custom_call.1} parent=11 // pred_check
          %p361 = pneg %p186
        $region22: #{tpu_custom_call.1} parent=11 // pred_check_branch
          %363 = sbr.rel (%p361) target = $region24
        $region23: #{tpu_custom_call.1} parent=11 // pred_region
          %s365 = ssub.s32 512, 512
          %366 = vsyncadd [#allocation11], %s365
          %s367 = sshll.u32 [#allocation10], 4
          %s368 = int_to_ptr.vmem [resolvable:$true] %s367
          %373 = dma.hbm_to_vmem [thread:$0]  %s5, 512, %s368, [#allocation11], 128, 128, 8
        $region24: #{tpu_custom_call.1} parent=11 // pred_fallthru
          _
        // Predicated region
        $region25: #{tpu_custom_call.1} parent=11 // pred_check
          %p374 = pneg %p207
        $region26: #{tpu_custom_call.1} parent=11 // pred_check_branch
          %376 = sbr.rel (%p374) target = $region28
        $region27: #{tpu_custom_call.1} parent=11 // pred_region
          %s378 = ssub.s32 512, 512
          %379 = vsyncadd [#allocation11], %s378
          %s380 = sshll.u32 [#allocation12], 4
          %s381 = int_to_ptr.vmem [resolvable:$true] %s380
          %386 = dma.hbm_to_vmem [thread:$0]  %s6, 512, %s381, [#allocation11], 128, 128, 8
        $region28: #{tpu_custom_call.1} parent=11 // pred_fallthru
          _
        // Predicated region
        $region29: #{tpu_custom_call.1} parent=11 // pred_check
          %p387 = pneg %p228
        $region30: #{tpu_custom_call.1} parent=11 // pred_check_branch
          %389 = sbr.rel (%p387) target = $region32
        $region31: #{tpu_custom_call.1} parent=11 // pred_region
          %s391 = ssub.s32 512, 512
          %392 = vsyncadd [#allocation14], %s391
          %s393 = sshll.u32 [#allocation13], 4
          %s394 = int_to_ptr.vmem [resolvable:$true] %s393
          %399 = dma.hbm_to_vmem [thread:$0]  %s7, 512, %s394, [#allocation14], 128, 128, 8
        $region32: #{tpu_custom_call.1} parent=11 // pred_fallthru
          _
        // Predicated region
        $region33: #{tpu_custom_call.1} parent=11 // pred_check
          %p400 = pneg %p249
        $region34: #{tpu_custom_call.1} parent=11 // pred_check_branch
          %402 = sbr.rel (%p400) target = $region36
        $region35: #{tpu_custom_call.1} parent=11 // pred_region
          _
        $region36: #{tpu_custom_call.1} parent=11 // pred_fallthru
          _
        // Predicated region
        $region37: #{tpu_custom_call.1} parent=11 // pred_check
          %p403 = pneg %p270
        $region38: #{tpu_custom_call.1} parent=11 // pred_check_branch
          %405 = sbr.rel (%p403) target = $region40
        $region39: #{tpu_custom_call.1} parent=11 // pred_region
          _
        $region40: #{tpu_custom_call.1} parent=11 // pred_fallthru
          _
        // Predicated region
        $region41: #{tpu_custom_call.1} parent=11 // pred_check
          %p406 = pneg %p291
        $region42: #{tpu_custom_call.1} parent=11 // pred_check_branch
          %408 = sbr.rel (%p406) target = $region44
        $region43: #{tpu_custom_call.1} parent=11 // pred_region
          _
        $region44: #{tpu_custom_call.1} parent=11 // pred_fallthru
          _
        // Predicated region
        $region45: #{tpu_custom_call.1} parent=11 // pred_check
          %p409 = pneg %p312
        $region46: #{tpu_custom_call.1} parent=11 // pred_check_branch
          %411 = sbr.rel (%p409) target = $region48
        $region47: #{tpu_custom_call.1} parent=11 // pred_region
          _
        $region48: #{tpu_custom_call.1} parent=11 // pred_fallthru
          _
      $region12: #{tpu_custom_call.1} parent=5 // pred_fallthru
        _
      %p412 = scmp.lt.s32.totalorder %s29, 2
      // Predicated region
      $region49: #{tpu_custom_call.1} parent=5 // pred_check
        %p413 = pneg %p412
      $region50: #{tpu_custom_call.1} parent=5 // pred_check_branch
        %415 = sbr.rel (%p413) target = $region52
      $region51: #{tpu_custom_call.1} parent=5 // pred_region
        // Predicated region
        $region53: #{tpu_custom_call.1} parent=51 // pred_check
          %p416 = pneg %p63
        $region54: #{tpu_custom_call.1} parent=51 // pred_check_branch
          %418 = sbr.rel (%p416) target = $region56
        $region55: #{tpu_custom_call.1} parent=51 // pred_region
          %s419 = sand.u32 %s53, 1
          %s420 = scalar_lea.sflag [#allocation5], %s419
          %s421 = sand.u32 %s53, 1
          %s422 = smul.addr %s421, 8
          %s423 = scalar_lea.vmem [#allocation4], %s422
          %s425 = ssub.s32 128, 128
          %426 = vsyncadd %s420, %s425
          %s427 = sadd.s32 %s37, %s36
          %s428 = smul.addr %s427, 128
          %s429 = scalar_lea.hbm %s0, %s428
          %s431 = sshll.u32 %s423, 4
          %s432 = int_to_ptr.vmem [resolvable:$true] %s431
          %434 = dma.hbm_to_vmem [thread:$0]  %s429, 128, %s432, %s420
        $region56: #{tpu_custom_call.1} parent=51 // pred_fallthru
          _
        // Predicated region
        $region57: #{tpu_custom_call.1} parent=51 // pred_check
          %p435 = pneg %p89
        $region58: #{tpu_custom_call.1} parent=51 // pred_check_branch
          %437 = sbr.rel (%p435) target = $region60
        $region59: #{tpu_custom_call.1} parent=51 // pred_region
          %s438 = sand.u32 %s29, 1
          %s439 = scalar_lea.sflag [#allocation8], %s438
          %s440 = sand.u32 %s79, 1
          %s441 = smul.addr %s440, 8
          %s442 = scalar_lea.vmem [#allocation7], %s441
          %s444 = ssub.s32 128, 128
          %445 = vsyncadd %s439, %s444
          %s446 = smul.addr %s36, 128
          %s447 = scalar_lea.hbm %s1, %s446
          %s449 = sshll.u32 %s442, 4
          %s450 = int_to_ptr.vmem [resolvable:$true] %s449
          %452 = dma.hbm_to_vmem [thread:$0]  %s447, 128, %s450, %s439
        $region60: #{tpu_custom_call.1} parent=51 // pred_fallthru
          _
        // Predicated region
        $region61: #{tpu_custom_call.1} parent=51 // pred_check
          %p453 = pneg %p117
        $region62: #{tpu_custom_call.1} parent=51 // pred_check_branch
          %455 = sbr.rel (%p453) target = $region64
        $region63: #{tpu_custom_call.1} parent=51 // pred_region
          %s456 = sand.u32 %s29, 1
          %s457 = scalar_lea.sflag [#allocation8], %s456
          %s458 = sand.u32 %s107, 1
          %s459 = smul.addr %s458, 64
          %s460 = scalar_lea.vmem [#allocation9], %s459
          %s461 = smul.u32 8, %s37
          %s463 = ssub.s32 1024, 1024
          %464 = vsyncadd %s457, %s463
          %s465 = smul.addr %s36, 8
          %s466 = sadd.s32 %s461, %s465
          %s467 = smul.addr %s466, 128
          %s468 = scalar_lea.hbm %s2, %s467
          %s469 = sshll.u32 %s460, 4
          %s470 = int_to_ptr.vmem [resolvable:$true] %s469
          %475 = dma.hbm_to_vmem [thread:$0]  %s468, 1024, %s470, %s457, 128, 128, 8
        $region64: #{tpu_custom_call.1} parent=51 // pred_fallthru
          _
      $region52: #{tpu_custom_call.1} parent=5 // pred_fallthru
        _
      %p476 = scmp.le.s32.totalorder 1, %s29
      %p477 = scmp.lt.s32.totalorder %s29, 3
      %p478 = pnand %p476, %p477
      %p479 = pneg %p478
      // Predicated region
      $region65: #{tpu_custom_call.1} parent=5 // pred_check
        _
      $region66: #{tpu_custom_call.1} parent=5 // pred_check_branch
        %481 = sbr.rel (%p478) target = $region68
      $region67: #{tpu_custom_call.1} parent=5 // pred_region
        %s482 = ssub.s32 %s29, 1
        %s483 = sand.u32 %s56, 1
        %s484 = scalar_lea.sflag [#allocation5], %s483
        %s485 = sand.u32 %s56, 1
        %s486 = smul.addr %s485, 8
        %s487 = scalar_lea.vmem [#allocation4], %s486
        // Predicated region
        $region69: #{tpu_custom_call.1} parent=67 // pred_check
          %p488 = pneg %p69
        $region70: #{tpu_custom_call.1} parent=67 // pred_check_branch
          %490 = sbr.rel (%p488) target = $region72
        $region71: #{tpu_custom_call.1} parent=67 // pred_region
          %491 = dma.done %s484, 128
        $region72: #{tpu_custom_call.1} parent=67 // pred_fallthru
          _
        %s492 = sand.u32 %s34, 1
        %s493 = scalar_lea.sflag [#allocation8], %s492
        %s494 = sand.u32 %s82, 1
        %s495 = smul.addr %s494, 8
        %s496 = scalar_lea.vmem [#allocation7], %s495
        // Predicated region
        $region73: #{tpu_custom_call.1} parent=67 // pred_check
          %p497 = pneg %p95
        $region74: #{tpu_custom_call.1} parent=67 // pred_check_branch
          %499 = sbr.rel (%p497) target = $region76
        $region75: #{tpu_custom_call.1} parent=67 // pred_region
          %500 = dma.done %s493, 128
        $region76: #{tpu_custom_call.1} parent=67 // pred_fallthru
          _
        %s501 = sand.u32 %s34, 1
        %s502 = scalar_lea.sflag [#allocation8], %s501
        %s503 = sand.u32 %s110, 1
        %s504 = smul.addr %s503, 64
        %s505 = scalar_lea.vmem [#allocation9], %s504
        // Predicated region
        $region77: #{tpu_custom_call.1} parent=67 // pred_check
          %p506 = pneg %p123
        $region78: #{tpu_custom_call.1} parent=67 // pred_check_branch
          %508 = sbr.rel (%p506) target = $region80
        $region79: #{tpu_custom_call.1} parent=67 // pred_region
          %509 = dma.done %s502, 1024
        $region80: #{tpu_custom_call.1} parent=67 // pred_fallthru
          _
        // Predicated region
        $region81: #{tpu_custom_call.1} parent=67 // pred_check
          %p510 = pneg %p186
        $region82: #{tpu_custom_call.1} parent=67 // pred_check_branch
          %512 = sbr.rel (%p510) target = $region84
        $region83: #{tpu_custom_call.1} parent=67 // pred_region
          %513 = dma.done [#allocation11], 512
        $region84: #{tpu_custom_call.1} parent=67 // pred_fallthru
          _
        // Predicated region
        $region85: #{tpu_custom_call.1} parent=67 // pred_check
          %p514 = pneg %p207
        $region86: #{tpu_custom_call.1} parent=67 // pred_check_branch
          %516 = sbr.rel (%p514) target = $region88
        $region87: #{tpu_custom_call.1} parent=67 // pred_region
          %517 = dma.done [#allocation11], 512
        $region88: #{tpu_custom_call.1} parent=67 // pred_fallthru
          _
        // Predicated region
        $region89: #{tpu_custom_call.1} parent=67 // pred_check
          %p518 = pneg %p228
        $region90: #{tpu_custom_call.1} parent=67 // pred_check_branch
          %520 = sbr.rel (%p518) target = $region92
        $region91: #{tpu_custom_call.1} parent=67 // pred_region
          %521 = dma.done [#allocation14], 512
        $region92: #{tpu_custom_call.1} parent=67 // pred_fallthru
          _
        %s522 = sand.u32 %s56, 1
        %s523 = scalar_lea.sflag [#allocation5], %s522
        %s524 = sand.u32 %s56, 1
        %s525 = smul.addr %s524, 8
        %s526 = scalar_lea.vmem [#allocation4], %s525
        %p527 = pneg %p69
        %p528 = pneg %p66
        %s529 = sand.u32 %s34, 1
        %s530 = scalar_lea.sflag [#allocation8], %s529
        %s531 = sand.u32 %s82, 1
        %s532 = smul.addr %s531, 8
        %s533 = scalar_lea.vmem [#allocation7], %s532
        %p534 = pneg %p95
        %p535 = pneg %p92
        %s536 = sand.u32 %s34, 1
        %s537 = scalar_lea.sflag [#allocation8], %s536
        %s538 = sand.u32 %s110, 1
        %s539 = smul.addr %s538, 64
        %s540 = scalar_lea.vmem [#allocation9], %s539
        %p541 = pneg %p123
        %p542 = pneg %p120
        %p543 = pneg %p144
        %p544 = pneg %p141
        %p545 = pneg %p165
        %p546 = pneg %p162
        %p547 = pneg %p186
        %p548 = pneg %p183
        %p549 = pneg %p207
        %p550 = pneg %p204
        %p551 = pneg %p228
        %p552 = pneg %p225
        %p553 = pneg %p249
        %p554 = pneg %p246
        %p555 = pneg %p270
        %p556 = pneg %p267
        %p557 = pneg %p291
        %p558 = pneg %p288
        %p559 = pneg %p312
        %p560 = pneg %p309
        %p561 = pneg %p340
        %p562 = pneg %p337
        %s563 = sand.u32 %s327, 1
        %s564 = scalar_lea.sflag [#allocation6], %s563
        %s565 = sand.u32 %s327, 1
        %s566 = smul.addr %s565, 8
        %s567 = scalar_lea.vmem [#allocation15], %s566
        %s568 = smul.u32 8, %s39
        %p569 = scmp.eq.s32.totalorder %s39, 0
        // Predicated region
        $region93: #{tpu_custom_call.1} parent=67 // pred_check
          %p570 = pneg %p569
        $region94: #{tpu_custom_call.1} parent=67 // pred_check_branch
          %572 = sbr.rel (%p570) target = $region96
        $region95: #{tpu_custom_call.1} parent=67 // pred_region
          %v573 = vld [vmem:[%s496] sm:$0xff]
          %v574 = vld [vmem:[%s3] sm:$0x1]
          %v575 = vld [vmem:[%s4] sm:$0x1]
          %vm576 = vcmask 261120
          %v577 = vsel %vm576, %v573, 0.0
          %578 = vadd.xlane.f32.xlu0 %v577
          %v579 = vpop.xlane.xlu0 %578
          %v580 = vrcp.pop 32.0
          %v581 = vmul.f32 %v579, %v580
          %v582 = vsub.f32 %v573, %v581
          %v583 = vmul.f32 %v582, %v582
          %v584 = vsel %vm576, %v583, 0.0
          %585 = vadd.xlane.f32.xlu0 %v584
          %v586 = vpop.xlane.xlu0 %585
          %v587 = vmul.f32 %v586, %v580
          %v588 = vadd.f32 %v587, 1e-05
          %v589 = vrsqrt.pop %v588
          %v590 = vmul.f32 %v582, %v589
          %v592 = vlaneseq
          %v593 = vshrl.u32 %v592, 7
          %v594 = vsub.s32 0, %v593
          %v595 = vrot.slane %v574, %v594
          %v597 = vmul.f32 %v590, %v595
          %v599 = vlaneseq
          %v600 = vshrl.u32 %v599, 7
          %v601 = vsub.s32 0, %v600
          %v602 = vrot.slane %v575, %v601
          %v604 = vadd.f32 %v597, %v602
          %v605 = vld [vmem:[#allocation12] sm:$0xff]
          %v606 = vld [vmem:[#allocation12 + $0x8] sm:$0xff]
          %v607 = vld [vmem:[#allocation12 + $0x10] sm:$0xff]
          %v608 = vld [vmem:[#allocation12 + $0x18] sm:$0xff]
          %v610 = vsel %vm576, %v604, 0
          %612 = vmatprep.subr.mxu0 0.0
          %613 = vmatpush1.msra.mxu0 0.0
          %614 = vmatprep.subr.mxu0 0.0
          %615 = vmatpush1.msra.mxu0 0.0
          %616 = vmatprep.subr.mxu0 0.0
          %617 = vmatpush1.msra.mxu0 0.0
          %618 = vmatprep.subr.mxu0 0.0
          %619 = vmatpush1.msra.mxu0 0.0
          %620 = vmatprep.subr.mxu0 0.0
          %621 = vmatpush1.msra.mxu0 0.0
          %622 = vmatprep.subr.mxu0 0.0
          %623 = vmatpush1.msra.mxu0 0.0
          %624 = vmatprep.subr.mxu0 0.0
          %625 = vmatpush1.msra.mxu0 0.0
          %626 = vmatprep.subr.mxu0 0.0
          %627 = vmatpush1.msra.mxu0 0.0
          %628 = vmatprep.subr.mxu0 0.0
          %629 = vmatpush1.msra.mxu0 0.0
          %630 = vmatprep.subr.mxu0 0.0
          %631 = vmatpush1.msra.mxu0 0.0
          %632 = vmatprep.subr.mxu0 0.0
          %633 = vmatpush1.msra.mxu0 0.0
          %634 = vmatprep.subr.mxu0 0.0
          %635 = vmatpush1.msra.mxu0 0.0
          %636 = vmatprep.subr.mxu0 0.0
          %637 = vmatpush1.msra.mxu0 %v608
          %638 = vmatprep.subr.mxu0 0.0
          %639 = vmatpush1.msra.mxu0 %v607
          %640 = vmatprep.subr.mxu0 0.0
          %641 = vmatpush1.msra.mxu0 %v606
          %642 = vmatprep.subr.mxu0 0.0
          %643 = vmatpush1.msra.mxu0 %v605
          %644 = vmatprep.subr.mxu0 0.0
          %645 = vmatpush2.msra.mxu0 0.0
          %646 = vmatprep.subr.mxu0 0.0
          %647 = vmatpush2.msra.mxu0 0.0
          %648 = vmatprep.subr.mxu0 0.0
          %649 = vmatpush2.msra.mxu0 0.0
          %650 = vmatprep.subr.mxu0 0.0
          %651 = vmatpush2.msra.mxu0 0.0
          %652 = vmatprep.subr.mxu0 0.0
          %653 = vmatpush2.msra.mxu0 0.0
          %654 = vmatprep.subr.mxu0 0.0
          %655 = vmatpush2.msra.mxu0 0.0
          %656 = vmatprep.subr.mxu0 0.0
          %657 = vmatpush2.msra.mxu0 0.0
          %658 = vmatprep.subr.mxu0 0.0
          %659 = vmatpush2.msra.mxu0 0.0
          %660 = vmatprep.subr.mxu0 0.0
          %661 = vmatpush2.msra.mxu0 0.0
          %662 = vmatprep.subr.mxu0 0.0
          %663 = vmatpush2.msra.mxu0 0.0
          %664 = vmatprep.subr.mxu0 0.0
          %665 = vmatpush2.msra.mxu0 0.0
          %666 = vmatprep.subr.mxu0 0.0
          %667 = vmatpush2.msra.mxu0 0.0
          %668 = vmatprep.subr.mxu0 0.0
          %669 = vmatpush2.msra.mxu0 0.0
          %670 = vmatprep.subr.mxu0 0.0
          %671 = vmatpush2.msra.mxu0 0.0
          %672 = vmatprep.subr.mxu0 0.0
          %673 = vmatpush2.msra.mxu0 0.0
          %674 = vmatprep.subr.mxu0 0.0
          %675 = vmatpush2.msra.mxu0 0.0
          %676 = vmatprep.mubr.f32.mxu0 0.0
          %677 = vmatmul.mubr.f32.gmra.mxu0 %v610
          %v678 = vpop.f32.mrf.mxu0
          %v679 = vadd.f32 0.0, %v678
          %v680 = vpop.f32.mrf.mxu0
          %681 = vdwg.mxu0
          %683 = vrot.lane.b32.xlu0 %v679, 120
          %v684 = vpop.permute.xlu0 %683
          %686 = vrot.lane.b32.xlu0 %v679, 112
          %v687 = vpop.permute.xlu0 %686
          %689 = vrot.lane.b32.xlu0 %v679, 104
          %v690 = vpop.permute.xlu0 %689
          %v692 = vcombine.low %v679, %v687
          %v693 = vcombine.high %v679, %v687
          %v695 = vunpack.c.l.s4 1983009808
          %v696 = vunpack.c.0.s8 %v695
          %v697 = vlaneseq
          %v698 = vshrl.u32 %v697, 7
          %v699 = vsub.s32 %v696, %v698
          %v700 = vrot.slane %v692, %v699
          %v702 = vunpack.c.l.s4 1983009808
          %v703 = vunpack.c.0.s8 %v702
          %v704 = vlaneseq
          %v705 = vshrl.u32 %v704, 7
          %v706 = vsub.s32 %v703, %v705
          %v707 = vrot.slane %v693, %v706
          %v708 = vcombine.low %v684, %v690
          %v709 = vcombine.high %v684, %v690
          %v711 = vunpack.c.l.s4 1983009808
          %v712 = vunpack.c.0.s8 %v711
          %v713 = vlaneseq
          %v714 = vshrl.u32 %v713, 7
          %v715 = vsub.s32 %v712, %v714
          %v716 = vrot.slane %v708, %v715
          %v718 = vunpack.c.l.s4 1983009808
          %v719 = vunpack.c.0.s8 %v718
          %v720 = vlaneseq
          %v721 = vshrl.u32 %v720, 7
          %v722 = vsub.s32 %v719, %v721
          %v723 = vrot.slane %v709, %v722
          %v724 = vcombine.low %v700, %v716
          %v725 = vcombine.high %v700, %v716
          %v727 = vunpack.c.l.s4 1934713408
          %v728 = vunpack.c.0.s8 %v727
          %v729 = vlaneseq
          %v730 = vshrl.u32 %v729, 7
          %v731 = vsub.s32 %v728, %v730
          %v732 = vrot.slane %v724, %v731
          %v734 = vunpack.c.l.s4 1934713408
          %v735 = vunpack.c.0.s8 %v734
          %v736 = vlaneseq
          %v737 = vshrl.u32 %v736, 7
          %v738 = vsub.s32 %v735, %v737
          %v739 = vrot.slane %v725, %v738
          %v740 = vcombine.low %v707, %v723
          %v741 = vcombine.high %v707, %v723
          %v743 = vunpack.c.l.s4 1934713408
          %v744 = vunpack.c.0.s8 %v743
          %v745 = vlaneseq
          %v746 = vshrl.u32 %v745, 7
          %v747 = vsub.s32 %v744, %v746
          %v748 = vrot.slane %v740, %v747
          %v750 = vunpack.c.l.s4 1934713408
          %v751 = vunpack.c.0.s8 %v750
          %v752 = vlaneseq
          %v753 = vshrl.u32 %v752, 7
          %v754 = vsub.s32 %v751, %v753
          %v755 = vrot.slane %v741, %v754
          %v756 = vcombine.high %v732, 0.0
          %v757 = vcombine.high %v739, 0.0
          %v758 = vcombine.high %v748, 0.0
          %v759 = vcombine.high %v755, 0.0
          %v760 = vcombine.low %v732, %v739
          %v762 = vunpack.c.l.s4 1983009808
          %v763 = vunpack.c.0.s8 %v762
          %v764 = vlaneseq
          %v765 = vshrl.u32 %v764, 7
          %v766 = vsub.s32 %v763, %v765
          %v767 = vrot.slane %v760, %v766
          %v768 = vcombine.low %v756, %v757
          %v770 = vunpack.c.l.s4 1983009808
          %v771 = vunpack.c.0.s8 %v770
          %v772 = vlaneseq
          %v773 = vshrl.u32 %v772, 7
          %v774 = vsub.s32 %v771, %v773
          %v775 = vrot.slane %v768, %v774
          %v776 = vcombine.low %v748, %v755
          %v778 = vunpack.c.l.s4 1983009808
          %v779 = vunpack.c.0.s8 %v778
          %v780 = vlaneseq
          %v781 = vshrl.u32 %v780, 7
          %v782 = vsub.s32 %v779, %v781
          %v783 = vrot.slane %v776, %v782
          %v784 = vcombine.low %v758, %v759
          %v786 = vunpack.c.l.s4 1983009808
          %v787 = vunpack.c.0.s8 %v786
          %v788 = vlaneseq
          %v789 = vshrl.u32 %v788, 7
          %v790 = vsub.s32 %v787, %v789
          %v791 = vrot.slane %v784, %v790
          %v792 = vcombine.low %v767, %v775
          %v793 = vcombine.high %v767, %v775
          %v795 = vunpack.c.l.s4 1934713408
          %v796 = vunpack.c.0.s8 %v795
          %v797 = vlaneseq
          %v798 = vshrl.u32 %v797, 7
          %v799 = vsub.s32 %v796, %v798
          %v800 = vrot.slane %v792, %v799
          %v802 = vunpack.c.l.s4 1934713408
          %v803 = vunpack.c.0.s8 %v802
          %v804 = vlaneseq
          %v805 = vshrl.u32 %v804, 7
          %v806 = vsub.s32 %v803, %v805
          %v807 = vrot.slane %v793, %v806
          %v808 = vcombine.low %v783, %v791
          %v809 = vcombine.high %v783, %v791
          %v811 = vunpack.c.l.s4 1934713408
          %v812 = vunpack.c.0.s8 %v811
          %v813 = vlaneseq
          %v814 = vshrl.u32 %v813, 7
          %v815 = vsub.s32 %v812, %v814
          %v816 = vrot.slane %v808, %v815
          %v818 = vunpack.c.l.s4 1934713408
          %v819 = vunpack.c.0.s8 %v818
          %v820 = vlaneseq
          %v821 = vshrl.u32 %v820, 7
          %v822 = vsub.s32 %v819, %v821
          %v823 = vrot.slane %v809, %v822
          %v824 = vcombine.low %v800, %v816
          %v825 = vcombine.high %v800, %v816
          %v826 = vcombine.low %v807, %v823
          %v827 = vcombine.high %v807, %v823
          %vm828 = vcmask 64512
          %829 = vst.msk [vmem:[#allocation2] sm:$0xff] %vm828, %v824
          %830 = vst.msk [vmem:[#allocation2 + $0x8] sm:$0xff] %vm828, %v825
          %831 = vst.msk [vmem:[#allocation2 + $0x10] sm:$0xff] %vm828, %v826
          %832 = vst.msk [vmem:[#allocation2 + $0x18] sm:$0xff] %vm828, %v827
          %833 = vrot.lane.b32.xlu0 %v679, 96
          %v834 = vpop.permute.xlu0 %833
          %835 = vrot.lane.b32.xlu0 %v684, 96
          %v836 = vpop.permute.xlu0 %835
          %837 = vrot.lane.b32.xlu0 %v687, 96
          %v838 = vpop.permute.xlu0 %837
          %839 = vrot.lane.b32.xlu0 %v690, 96
          %v840 = vpop.permute.xlu0 %839
          %v845 = vcombine.low %v834, %v838
          %v846 = vcombine.high %v834, %v838
          %v848 = vunpack.c.l.s4 1983009808
          %v849 = vunpack.c.0.s8 %v848
          %v850 = vlaneseq
          %v851 = vshrl.u32 %v850, 7
          %v852 = vsub.s32 %v849, %v851
          %v853 = vrot.slane %v845, %v852
          %v855 = vunpack.c.l.s4 1983009808
          %v856 = vunpack.c.0.s8 %v855
          %v857 = vlaneseq
          %v858 = vshrl.u32 %v857, 7
          %v859 = vsub.s32 %v856, %v858
          %v860 = vrot.slane %v846, %v859
          %v861 = vcombine.low %v836, %v840
          %v862 = vcombine.high %v836, %v840
          %v864 = vunpack.c.l.s4 1983009808
          %v865 = vunpack.c.0.s8 %v864
          %v866 = vlaneseq
          %v867 = vshrl.u32 %v866, 7
          %v868 = vsub.s32 %v865, %v867
          %v869 = vrot.slane %v861, %v868
          %v871 = vunpack.c.l.s4 1983009808
          %v872 = vunpack.c.0.s8 %v871
          %v873 = vlaneseq
          %v874 = vshrl.u32 %v873, 7
          %v875 = vsub.s32 %v872, %v874
          %v876 = vrot.slane %v862, %v875
          %v877 = vcombine.low %v853, %v869
          %v878 = vcombine.high %v853, %v869
          %v880 = vunpack.c.l.s4 1934713408
          %v881 = vunpack.c.0.s8 %v880
          %v882 = vlaneseq
          %v883 = vshrl.u32 %v882, 7
          %v884 = vsub.s32 %v881, %v883
          %v885 = vrot.slane %v877, %v884
          %v887 = vunpack.c.l.s4 1934713408
          %v888 = vunpack.c.0.s8 %v887
          %v889 = vlaneseq
          %v890 = vshrl.u32 %v889, 7
          %v891 = vsub.s32 %v888, %v890
          %v892 = vrot.slane %v878, %v891
          %v893 = vcombine.low %v860, %v876
          %v894 = vcombine.high %v860, %v876
          %v896 = vunpack.c.l.s4 1934713408
          %v897 = vunpack.c.0.s8 %v896
          %v898 = vlaneseq
          %v899 = vshrl.u32 %v898, 7
          %v900 = vsub.s32 %v897, %v899
          %v901 = vrot.slane %v893, %v900
          %v903 = vunpack.c.l.s4 1934713408
          %v904 = vunpack.c.0.s8 %v903
          %v905 = vlaneseq
          %v906 = vshrl.u32 %v905, 7
          %v907 = vsub.s32 %v904, %v906
          %v908 = vrot.slane %v894, %v907
          %v909 = vcombine.high %v885, 0.0
          %v910 = vcombine.high %v892, 0.0
          %v911 = vcombine.high %v901, 0.0
          %v912 = vcombine.high %v908, 0.0
          %v913 = vcombine.low %v885, %v892
          %v915 = vunpack.c.l.s4 1983009808
          %v916 = vunpack.c.0.s8 %v915
          %v917 = vlaneseq
          %v918 = vshrl.u32 %v917, 7
          %v919 = vsub.s32 %v916, %v918
          %v920 = vrot.slane %v913, %v919
          %v921 = vcombine.low %v909, %v910
          %v923 = vunpack.c.l.s4 1983009808
          %v924 = vunpack.c.0.s8 %v923
          %v925 = vlaneseq
          %v926 = vshrl.u32 %v925, 7
          %v927 = vsub.s32 %v924, %v926
          %v928 = vrot.slane %v921, %v927
          %v929 = vcombine.low %v901, %v908
          %v931 = vunpack.c.l.s4 1983009808
          %v932 = vunpack.c.0.s8 %v931
          %v933 = vlaneseq
          %v934 = vshrl.u32 %v933, 7
          %v935 = vsub.s32 %v932, %v934
          %v936 = vrot.slane %v929, %v935
          %v937 = vcombine.low %v911, %v912
          %v939 = vunpack.c.l.s4 1983009808
          %v940 = vunpack.c.0.s8 %v939
          %v941 = vlaneseq
          %v942 = vshrl.u32 %v941, 7
          %v943 = vsub.s32 %v940, %v942
          %v944 = vrot.slane %v937, %v943
          %v945 = vcombine.low %v920, %v928
          %v946 = vcombine.high %v920, %v928
          %v948 = vunpack.c.l.s4 1934713408
          %v949 = vunpack.c.0.s8 %v948
          %v950 = vlaneseq
          %v951 = vshrl.u32 %v950, 7
          %v952 = vsub.s32 %v949, %v951
          %v953 = vrot.slane %v945, %v952
          %v955 = vunpack.c.l.s4 1934713408
          %v956 = vunpack.c.0.s8 %v955
          %v957 = vlaneseq
          %v958 = vshrl.u32 %v957, 7
          %v959 = vsub.s32 %v956, %v958
          %v960 = vrot.slane %v946, %v959
          %v961 = vcombine.low %v936, %v944
          %v962 = vcombine.high %v936, %v944
          %v964 = vunpack.c.l.s4 1934713408
          %v965 = vunpack.c.0.s8 %v964
          %v966 = vlaneseq
          %v967 = vshrl.u32 %v966, 7
          %v968 = vsub.s32 %v965, %v967
          %v969 = vrot.slane %v961, %v968
          %v971 = vunpack.c.l.s4 1934713408
          %v972 = vunpack.c.0.s8 %v971
          %v973 = vlaneseq
          %v974 = vshrl.u32 %v973, 7
          %v975 = vsub.s32 %v972, %v974
          %v976 = vrot.slane %v962, %v975
          %v977 = vcombine.low %v953, %v969
          %v978 = vcombine.high %v953, %v969
          %v979 = vcombine.low %v960, %v976
          %v980 = vcombine.high %v960, %v976
          %981 = vst.msk [vmem:[#allocation3] sm:$0xff] %vm828, %v977
          %982 = vst.msk [vmem:[#allocation3 + $0x8] sm:$0xff] %vm828, %v978
          %983 = vst.msk [vmem:[#allocation3 + $0x10] sm:$0xff] %vm828, %v979
          %984 = vst.msk [vmem:[#allocation3 + $0x18] sm:$0xff] %vm828, %v980
        $region96: #{tpu_custom_call.1} parent=67 // pred_fallthru
          _
        %v985 = vld [vmem:[%s487] sm:$0xff]
        %v986 = vld [vmem:[%s3] sm:$0x1]
        %v987 = vld [vmem:[%s4] sm:$0x1]
        %vm988 = vcmask 261120
        %v989 = vsel %vm988, %v985, 0.0
        %990 = vadd.xlane.f32.xlu0 %v989
        %v991 = vpop.xlane.xlu0 %990
        %v992 = vrcp.pop 32.0
        %v993 = vmul.f32 %v991, %v992
        %v994 = vsub.f32 %v985, %v993
        %v995 = vmul.f32 %v994, %v994
        %v996 = vsel %vm988, %v995, 0.0
        %997 = vadd.xlane.f32.xlu0 %v996
        %v998 = vpop.xlane.xlu0 %997
        %v999 = vmul.f32 %v998, %v992
        %v1000 = vadd.f32 %v999, 1e-05
        %v1001 = vrsqrt.pop %v1000
        %v1002 = vmul.f32 %v994, %v1001
        %v1004 = vlaneseq
        %v1005 = vshrl.u32 %v1004, 7
        %v1006 = vsub.s32 0, %v1005
        %v1007 = vrot.slane %v986, %v1006
        %v1009 = vmul.f32 %v1002, %v1007
        %v1011 = vlaneseq
        %v1012 = vshrl.u32 %v1011, 7
        %v1013 = vsub.s32 0, %v1012
        %v1014 = vrot.slane %v987, %v1013
        %v1016 = vadd.f32 %v1009, %v1014
        %v1017 = vld [vmem:[#allocation10] sm:$0xff]
        %v1018 = vld [vmem:[#allocation10 + $0x8] sm:$0xff]
        %v1019 = vld [vmem:[#allocation10 + $0x10] sm:$0xff]
        %v1020 = vld [vmem:[#allocation10 + $0x18] sm:$0xff]
        %v1022 = vsel %vm988, %v1016, 0
        %1024 = vmatprep.subr.mxu0 0.0
        %1025 = vmatpush1.msra.mxu0 0.0
        %1026 = vmatprep.subr.mxu0 0.0
        %1027 = vmatpush1.msra.mxu0 0.0
        %1028 = vmatprep.subr.mxu0 0.0
        %1029 = vmatpush1.msra.mxu0 0.0
        %1030 = vmatprep.subr.mxu0 0.0
        %1031 = vmatpush1.msra.mxu0 0.0
        %1032 = vmatprep.subr.mxu0 0.0
        %1033 = vmatpush1.msra.mxu0 0.0
        %1034 = vmatprep.subr.mxu0 0.0
        %1035 = vmatpush1.msra.mxu0 0.0
        %1036 = vmatprep.subr.mxu0 0.0
        %1037 = vmatpush1.msra.mxu0 0.0
        %1038 = vmatprep.subr.mxu0 0.0
        %1039 = vmatpush1.msra.mxu0 0.0
        %1040 = vmatprep.subr.mxu0 0.0
        %1041 = vmatpush1.msra.mxu0 0.0
        %1042 = vmatprep.subr.mxu0 0.0
        %1043 = vmatpush1.msra.mxu0 0.0
        %1044 = vmatprep.subr.mxu0 0.0
        %1045 = vmatpush1.msra.mxu0 0.0
        %1046 = vmatprep.subr.mxu0 0.0
        %1047 = vmatpush1.msra.mxu0 0.0
        %1048 = vmatprep.subr.mxu0 0.0
        %1049 = vmatpush1.msra.mxu0 %v1020
        %1050 = vmatprep.subr.mxu0 0.0
        %1051 = vmatpush1.msra.mxu0 %v1019
        %1052 = vmatprep.subr.mxu0 0.0
        %1053 = vmatpush1.msra.mxu0 %v1018
        %1054 = vmatprep.subr.mxu0 0.0
        %1055 = vmatpush1.msra.mxu0 %v1017
        %1056 = vmatprep.subr.mxu0 0.0
        %1057 = vmatpush2.msra.mxu0 0.0
        %1058 = vmatprep.subr.mxu0 0.0
        %1059 = vmatpush2.msra.mxu0 0.0
        %1060 = vmatprep.subr.mxu0 0.0
        %1061 = vmatpush2.msra.mxu0 0.0
        %1062 = vmatprep.subr.mxu0 0.0
        %1063 = vmatpush2.msra.mxu0 0.0
        %1064 = vmatprep.subr.mxu0 0.0
        %1065 = vmatpush2.msra.mxu0 0.0
        %1066 = vmatprep.subr.mxu0 0.0
        %1067 = vmatpush2.msra.mxu0 0.0
        %1068 = vmatprep.subr.mxu0 0.0
        %1069 = vmatpush2.msra.mxu0 0.0
        %1070 = vmatprep.subr.mxu0 0.0
        %1071 = vmatpush2.msra.mxu0 0.0
        %1072 = vmatprep.subr.mxu0 0.0
        %1073 = vmatpush2.msra.mxu0 0.0
        %1074 = vmatprep.subr.mxu0 0.0
        %1075 = vmatpush2.msra.mxu0 0.0
        %1076 = vmatprep.subr.mxu0 0.0
        %1077 = vmatpush2.msra.mxu0 0.0
        %1078 = vmatprep.subr.mxu0 0.0
        %1079 = vmatpush2.msra.mxu0 0.0
        %1080 = vmatprep.subr.mxu0 0.0
        %1081 = vmatpush2.msra.mxu0 0.0
        %1082 = vmatprep.subr.mxu0 0.0
        %1083 = vmatpush2.msra.mxu0 0.0
        %1084 = vmatprep.subr.mxu0 0.0
        %1085 = vmatpush2.msra.mxu0 0.0
        %1086 = vmatprep.subr.mxu0 0.0
        %1087 = vmatpush2.msra.mxu0 0.0
        %1088 = vmatprep.mubr.f32.mxu0 0.0
        %1089 = vmatmul.mubr.f32.gmra.mxu0 %v1022
        %v1090 = vpop.f32.mrf.mxu0
        %v1091 = vadd.f32 0.0, %v1090
        %v1092 = vpop.f32.mrf.mxu0
        %1093 = vdwg.mxu0
        %v1094 = vmul.f32 %v1091, 0.35355338
        %1096 = vrot.lane.b32.xlu0 %v1094, 120
        %v1097 = vpop.permute.xlu0 %1096
        %1099 = vrot.lane.b32.xlu0 %v1094, 112
        %v1100 = vpop.permute.xlu0 %1099
        %1102 = vrot.lane.b32.xlu0 %v1094, 104
        %v1103 = vpop.permute.xlu0 %1102
        %v1105 = vcombine.low %v1094, %v1100
        %v1106 = vcombine.high %v1094, %v1100
        %v1108 = vunpack.c.l.s4 1983009808
        %v1109 = vunpack.c.0.s8 %v1108
        %v1110 = vlaneseq
        %v1111 = vshrl.u32 %v1110, 7
        %v1112 = vsub.s32 %v1109, %v1111
        %v1113 = vrot.slane %v1105, %v1112
        %v1115 = vunpack.c.l.s4 1983009808
        %v1116 = vunpack.c.0.s8 %v1115
        %v1117 = vlaneseq
        %v1118 = vshrl.u32 %v1117, 7
        %v1119 = vsub.s32 %v1116, %v1118
        %v1120 = vrot.slane %v1106, %v1119
        %v1121 = vcombine.low %v1097, %v1103
        %v1122 = vcombine.high %v1097, %v1103
        %v1124 = vunpack.c.l.s4 1983009808
        %v1125 = vunpack.c.0.s8 %v1124
        %v1126 = vlaneseq
        %v1127 = vshrl.u32 %v1126, 7
        %v1128 = vsub.s32 %v1125, %v1127
        %v1129 = vrot.slane %v1121, %v1128
        %v1131 = vunpack.c.l.s4 1983009808
        %v1132 = vunpack.c.0.s8 %v1131
        %v1133 = vlaneseq
        %v1134 = vshrl.u32 %v1133, 7
        %v1135 = vsub.s32 %v1132, %v1134
        %v1136 = vrot.slane %v1122, %v1135
        %v1137 = vcombine.low %v1113, %v1129
        %v1138 = vcombine.high %v1113, %v1129
        %v1140 = vunpack.c.l.s4 1934713408
        %v1141 = vunpack.c.0.s8 %v1140
        %v1142 = vlaneseq
        %v1143 = vshrl.u32 %v1142, 7
        %v1144 = vsub.s32 %v1141, %v1143
        %v1145 = vrot.slane %v1137, %v1144
        %v1147 = vunpack.c.l.s4 1934713408
        %v1148 = vunpack.c.0.s8 %v1147
        %v1149 = vlaneseq
        %v1150 = vshrl.u32 %v1149, 7
        %v1151 = vsub.s32 %v1148, %v1150
        %v1152 = vrot.slane %v1138, %v1151
        %v1153 = vcombine.low %v1120, %v1136
        %v1154 = vcombine.high %v1120, %v1136
        %v1156 = vunpack.c.l.s4 1934713408
        %v1157 = vunpack.c.0.s8 %v1156
        %v1158 = vlaneseq
        %v1159 = vshrl.u32 %v1158, 7
        %v1160 = vsub.s32 %v1157, %v1159
        %v1161 = vrot.slane %v1153, %v1160
        %v1163 = vunpack.c.l.s4 1934713408
        %v1164 = vunpack.c.0.s8 %v1163
        %v1165 = vlaneseq
        %v1166 = vshrl.u32 %v1165, 7
        %v1167 = vsub.s32 %v1164, %v1166
        %v1168 = vrot.slane %v1154, %v1167
        %v1169 = vcombine.high %v1145, 0.0
        %v1170 = vcombine.high %v1152, 0.0
        %v1171 = vcombine.high %v1161, 0.0
        %v1172 = vcombine.high %v1168, 0.0
        %v1173 = vcombine.low %v1145, %v1152
        %v1175 = vunpack.c.l.s4 1983009808
        %v1176 = vunpack.c.0.s8 %v1175
        %v1177 = vlaneseq
        %v1178 = vshrl.u32 %v1177, 7
        %v1179 = vsub.s32 %v1176, %v1178
        %v1180 = vrot.slane %v1173, %v1179
        %v1181 = vcombine.low %v1169, %v1170
        %v1183 = vunpack.c.l.s4 1983009808
        %v1184 = vunpack.c.0.s8 %v1183
        %v1185 = vlaneseq
        %v1186 = vshrl.u32 %v1185, 7
        %v1187 = vsub.s32 %v1184, %v1186
        %v1188 = vrot.slane %v1181, %v1187
        %v1189 = vcombine.low %v1161, %v1168
        %v1191 = vunpack.c.l.s4 1983009808
        %v1192 = vunpack.c.0.s8 %v1191
        %v1193 = vlaneseq
        %v1194 = vshrl.u32 %v1193, 7
        %v1195 = vsub.s32 %v1192, %v1194
        %v1196 = vrot.slane %v1189, %v1195
        %v1197 = vcombine.low %v1171, %v1172
        %v1199 = vunpack.c.l.s4 1983009808
        %v1200 = vunpack.c.0.s8 %v1199
        %v1201 = vlaneseq
        %v1202 = vshrl.u32 %v1201, 7
        %v1203 = vsub.s32 %v1200, %v1202
        %v1204 = vrot.slane %v1197, %v1203
        %v1205 = vcombine.low %v1180, %v1188
        %v1206 = vcombine.high %v1180, %v1188
        %v1208 = vunpack.c.l.s4 1934713408
        %v1209 = vunpack.c.0.s8 %v1208
        %v1210 = vlaneseq
        %v1211 = vshrl.u32 %v1210, 7
        %v1212 = vsub.s32 %v1209, %v1211
        %v1213 = vrot.slane %v1205, %v1212
        %v1215 = vunpack.c.l.s4 1934713408
        %v1216 = vunpack.c.0.s8 %v1215
        %v1217 = vlaneseq
        %v1218 = vshrl.u32 %v1217, 7
        %v1219 = vsub.s32 %v1216, %v1218
        %v1220 = vrot.slane %v1206, %v1219
        %v1221 = vcombine.low %v1196, %v1204
        %v1222 = vcombine.high %v1196, %v1204
        %v1224 = vunpack.c.l.s4 1934713408
        %v1225 = vunpack.c.0.s8 %v1224
        %v1226 = vlaneseq
        %v1227 = vshrl.u32 %v1226, 7
        %v1228 = vsub.s32 %v1225, %v1227
        %v1229 = vrot.slane %v1221, %v1228
        %v1231 = vunpack.c.l.s4 1934713408
        %v1232 = vunpack.c.0.s8 %v1231
        %v1233 = vlaneseq
        %v1234 = vshrl.u32 %v1233, 7
        %v1235 = vsub.s32 %v1232, %v1234
        %v1236 = vrot.slane %v1222, %v1235
        %v1237 = vcombine.low %v1213, %v1229
        %v1238 = vcombine.high %v1213, %v1229
        %v1239 = vcombine.low %v1220, %v1236
        %v1240 = vcombine.high %v1220, %v1236
        %v1241 = vld [vmem:[#allocation2] sm:$0xff]
        %v1242 = vld [vmem:[#allocation2 + $0x8] sm:$0xff]
        %v1243 = vld [vmem:[#allocation2 + $0x10] sm:$0xff]
        %v1244 = vld [vmem:[#allocation2 + $0x18] sm:$0xff]
        %v1245 = vld [vmem:[#allocation3] sm:$0xff]
        %v1246 = vld [vmem:[#allocation3 + $0x8] sm:$0xff]
        %v1247 = vld [vmem:[#allocation3 + $0x10] sm:$0xff]
        %v1248 = vld [vmem:[#allocation3 + $0x18] sm:$0xff]
        %v1249 = vld [vmem:[%s505] sm:$0xff]
        %v1250 = vld [vmem:[%s505 + $0x8] sm:$0xff]
        %v1251 = vld [vmem:[%s505 + $0x10] sm:$0xff]
        %v1252 = vld [vmem:[%s505 + $0x18] sm:$0xff]
        %v1253 = vld [vmem:[%s505 + $0x20] sm:$0xff]
        %v1254 = vld [vmem:[%s505 + $0x28] sm:$0xff]
        %v1255 = vld [vmem:[%s505 + $0x30] sm:$0xff]
        %v1256 = vld [vmem:[%s505 + $0x38] sm:$0xff]
        %v1257 = vld [vmem:[%s9] sm:$0x1]
        %v1258 = vld [vmem:[%s10] sm:$0x1]
        %vm1259 = vcmask 130048
        %v1260 = vsel %vm1259, %v1249, 0.0
        %1261 = vadd.xlane.f32.xlu0 %v1260
        %v1262 = vpop.xlane.xlu0 %1261
        %v1263 = vsel %vm1259, %v1250, 0.0
        %1264 = vadd.xlane.f32.xlu0 %v1263
        %v1265 = vpop.xlane.xlu0 %1264
        %v1266 = vsel %vm1259, %v1251, 0.0
        %1267 = vadd.xlane.f32.xlu0 %v1266
        %v1268 = vpop.xlane.xlu0 %1267
        %v1269 = vsel %vm1259, %v1252, 0.0
        %1270 = vadd.xlane.f32.xlu0 %v1269
        %v1271 = vpop.xlane.xlu0 %1270
        %v1272 = vsel %vm1259, %v1253, 0.0
        %1273 = vadd.xlane.f32.xlu0 %v1272
        %v1274 = vpop.xlane.xlu0 %1273
        %v1275 = vsel %vm1259, %v1254, 0.0
        %1276 = vadd.xlane.f32.xlu0 %v1275
        %v1277 = vpop.xlane.xlu0 %1276
        %v1278 = vsel %vm1259, %v1255, 0.0
        %1279 = vadd.xlane.f32.xlu0 %v1278
        %v1280 = vpop.xlane.xlu0 %1279
        %v1281 = vsel %vm1259, %v1256, 0.0
        %1282 = vadd.xlane.f32.xlu0 %v1281
        %v1283 = vpop.xlane.xlu0 %1282
        %v1284 = vrcp.pop 16.0
        %v1285 = vmul.f32 %v1262, %v1284
        %v1286 = vmul.f32 %v1265, %v1284
        %v1287 = vmul.f32 %v1268, %v1284
        %v1288 = vmul.f32 %v1271, %v1284
        %v1289 = vmul.f32 %v1274, %v1284
        %v1290 = vmul.f32 %v1277, %v1284
        %v1291 = vmul.f32 %v1280, %v1284
        %v1292 = vmul.f32 %v1283, %v1284
        %v1293 = vsub.f32 %v1249, %v1285
        %v1294 = vsub.f32 %v1250, %v1286
        %v1295 = vsub.f32 %v1251, %v1287
        %v1296 = vsub.f32 %v1252, %v1288
        %v1297 = vsub.f32 %v1253, %v1289
        %v1298 = vsub.f32 %v1254, %v1290
        %v1299 = vsub.f32 %v1255, %v1291
        %v1300 = vsub.f32 %v1256, %v1292
        %v1301 = vmul.f32 %v1293, %v1293
        %v1302 = vmul.f32 %v1294, %v1294
        %v1303 = vmul.f32 %v1295, %v1295
        %v1304 = vmul.f32 %v1296, %v1296
        %v1305 = vmul.f32 %v1297, %v1297
        %v1306 = vmul.f32 %v1298, %v1298
        %v1307 = vmul.f32 %v1299, %v1299
        %v1308 = vmul.f32 %v1300, %v1300
        %v1309 = vsel %vm1259, %v1301, 0.0
        %1310 = vadd.xlane.f32.xlu0 %v1309
        %v1311 = vpop.xlane.xlu0 %1310
        %v1312 = vsel %vm1259, %v1302, 0.0
        %1313 = vadd.xlane.f32.xlu0 %v1312
        %v1314 = vpop.xlane.xlu0 %1313
        %v1315 = vsel %vm1259, %v1303, 0.0
        %1316 = vadd.xlane.f32.xlu0 %v1315
        %v1317 = vpop.xlane.xlu0 %1316
        %v1318 = vsel %vm1259, %v1304, 0.0
        %1319 = vadd.xlane.f32.xlu0 %v1318
        %v1320 = vpop.xlane.xlu0 %1319
        %v1321 = vsel %vm1259, %v1305, 0.0
        %1322 = vadd.xlane.f32.xlu0 %v1321
        %v1323 = vpop.xlane.xlu0 %1322
        %v1324 = vsel %vm1259, %v1306, 0.0
        %1325 = vadd.xlane.f32.xlu0 %v1324
        %v1326 = vpop.xlane.xlu0 %1325
        %v1327 = vsel %vm1259, %v1307, 0.0
        %1328 = vadd.xlane.f32.xlu0 %v1327
        %v1329 = vpop.xlane.xlu0 %1328
        %v1330 = vsel %vm1259, %v1308, 0.0
        %1331 = vadd.xlane.f32.xlu0 %v1330
        %v1332 = vpop.xlane.xlu0 %1331
        %v1333 = vmul.f32 %v1311, %v1284
        %v1334 = vmul.f32 %v1314, %v1284
        %v1335 = vmul.f32 %v1317, %v1284
        %v1336 = vmul.f32 %v1320, %v1284
        %v1337 = vmul.f32 %v1323, %v1284
        %v1338 = vmul.f32 %v1326, %v1284
        %v1339 = vmul.f32 %v1329, %v1284
        %v1340 = vmul.f32 %v1332, %v1284
        %v1341 = vadd.f32 %v1333, 1e-05
        %v1342 = vadd.f32 %v1334, 1e-05
        %v1343 = vadd.f32 %v1335, 1e-05
        %v1344 = vadd.f32 %v1336, 1e-05
        %v1345 = vadd.f32 %v1337, 1e-05
        %v1346 = vadd.f32 %v1338, 1e-05
        %v1347 = vadd.f32 %v1339, 1e-05
        %v1348 = vadd.f32 %v1340, 1e-05
        %v1349 = vrsqrt.pop %v1341
        %v1350 = vrsqrt.pop %v1342
        %v1351 = vrsqrt.pop %v1343
        %v1352 = vrsqrt.pop %v1344
        %v1353 = vrsqrt.pop %v1345
        %v1354 = vrsqrt.pop %v1346
        %v1355 = vrsqrt.pop %v1347
        %v1356 = vrsqrt.pop %v1348
        %v1357 = vmul.f32 %v1293, %v1349
        %v1358 = vmul.f32 %v1294, %v1350
        %v1359 = vmul.f32 %v1295, %v1351
        %v1360 = vmul.f32 %v1296, %v1352
        %v1361 = vmul.f32 %v1297, %v1353
        %v1362 = vmul.f32 %v1298, %v1354
        %v1363 = vmul.f32 %v1299, %v1355
        %v1364 = vmul.f32 %v1300, %v1356
        %v1366 = vlaneseq
        %v1367 = vshrl.u32 %v1366, 7
        %v1368 = vsub.s32 0, %v1367
        %v1369 = vrot.slane %v1257, %v1368
        %v1371 = vmul.f32 %v1357, %v1369
        %v1372 = vmul.f32 %v1358, %v1369
        %v1373 = vmul.f32 %v1359, %v1369
        %v1374 = vmul.f32 %v1360, %v1369
        %v1375 = vmul.f32 %v1361, %v1369
        %v1376 = vmul.f32 %v1362, %v1369
        %v1377 = vmul.f32 %v1363, %v1369
        %v1378 = vmul.f32 %v1364, %v1369
        %v1380 = vlaneseq
        %v1381 = vshrl.u32 %v1380, 7
        %v1382 = vsub.s32 0, %v1381
        %v1383 = vrot.slane %v1258, %v1382
        %v1385 = vadd.f32 %v1371, %v1383
        %v1386 = vadd.f32 %v1372, %v1383
        %v1387 = vadd.f32 %v1373, %v1383
        %v1388 = vadd.f32 %v1374, %v1383
        %v1389 = vadd.f32 %v1375, %v1383
        %v1390 = vadd.f32 %v1376, %v1383
        %v1391 = vadd.f32 %v1377, %v1383
        %v1392 = vadd.f32 %v1378, %v1383
        %v1393 = vld [vmem:[%s11] sm:$0xf]
        %v1395 = vsel %vm1259, %v1393, 0
        %v1398 = vsel %vm1259, %v1385, 0
        %v1401 = vsel %vm1259, %v1386, 0
        %v1404 = vsel %vm1259, %v1387, 0
        %v1407 = vsel %vm1259, %v1388, 0
        %v1410 = vsel %vm1259, %v1389, 0
        %v1413 = vsel %vm1259, %v1390, 0
        %v1416 = vsel %vm1259, %v1391, 0
        %v1419 = vsel %vm1259, %v1392, 0
        %1421 = vmatprep.subr.mxu0 0.0
        %1422 = vmatpush1.xpose.msra.mxu0 0.0
        %1423 = vmatprep.subr.mxu0 0.0
        %1424 = vmatpush1.xpose.msra.mxu0 0.0
        %1425 = vmatprep.subr.mxu0 0.0
        %1426 = vmatpush1.xpose.msra.mxu0 0.0
        %1427 = vmatprep.subr.mxu0 0.0
        %1428 = vmatpush1.xpose.msra.mxu0 0.0
        %1429 = vmatprep.subr.mxu0 0.0
        %1430 = vmatpush1.xpose.msra.mxu0 0.0
        %1431 = vmatprep.subr.mxu0 0.0
        %1432 = vmatpush1.xpose.msra.mxu0 0.0
        %1433 = vmatprep.subr.mxu0 0.0
        %1434 = vmatpush1.xpose.msra.mxu0 0.0
        %1435 = vmatprep.subr.mxu0 0.0
        %1436 = vmatpush1.xpose.msra.mxu0 0.0
        %1437 = vmatprep.subr.mxu0 0.0
        %1438 = vmatpush1.xpose.msra.mxu0 %v1419
        %1439 = vmatprep.subr.mxu0 0.0
        %1440 = vmatpush1.xpose.msra.mxu0 %v1416
        %1441 = vmatprep.subr.mxu0 0.0
        %1442 = vmatpush1.xpose.msra.mxu0 %v1413
        %1443 = vmatprep.subr.mxu0 0.0
        %1444 = vmatpush1.xpose.msra.mxu0 %v1410
        %1445 = vmatprep.subr.mxu0 0.0
        %1446 = vmatpush1.xpose.msra.mxu0 %v1407
        %1447 = vmatprep.subr.mxu0 0.0
        %1448 = vmatpush1.xpose.msra.mxu0 %v1404
        %1449 = vmatprep.subr.mxu0 0.0
        %1450 = vmatpush1.xpose.msra.mxu0 %v1401
        %1451 = vmatprep.subr.mxu0 0.0
        %1452 = vmatpush1.xpose.msra.mxu0 %v1398
        %1453 = vmatprep.subr.mxu0 0.0
        %1454 = vmatpush2.xpose.msra.mxu0 0.0
        %1455 = vmatprep.subr.mxu0 0.0
        %1456 = vmatpush2.xpose.msra.mxu0 0.0
        %1457 = vmatprep.subr.mxu0 0.0
        %1458 = vmatpush2.xpose.msra.mxu0 0.0
        %1459 = vmatprep.subr.mxu0 0.0
        %1460 = vmatpush2.xpose.msra.mxu0 0.0
        %1461 = vmatprep.subr.mxu0 0.0
        %1462 = vmatpush2.xpose.msra.mxu0 0.0
        %1463 = vmatprep.subr.mxu0 0.0
        %1464 = vmatpush2.xpose.msra.mxu0 0.0
        %1465 = vmatprep.subr.mxu0 0.0
        %1466 = vmatpush2.xpose.msra.mxu0 0.0
        %1467 = vmatprep.subr.mxu0 0.0
        %1468 = vmatpush2.xpose.msra.mxu0 0.0
        %1469 = vmatprep.subr.mxu0 0.0
        %1470 = vmatpush2.xpose.msra.mxu0 0.0
        %1471 = vmatprep.subr.mxu0 0.0
        %1472 = vmatpush2.xpose.msra.mxu0 0.0
        %1473 = vmatprep.subr.mxu0 0.0
        %1474 = vmatpush2.xpose.msra.mxu0 0.0
        %1475 = vmatprep.subr.mxu0 0.0
        %1476 = vmatpush2.xpose.msra.mxu0 0.0
        %1477 = vmatprep.subr.mxu0 0.0
        %1478 = vmatpush2.xpose.msra.mxu0 0.0
        %1479 = vmatprep.subr.mxu0 0.0
        %1480 = vmatpush2.xpose.msra.mxu0 0.0
        %1481 = vmatprep.subr.mxu0 0.0
        %1482 = vmatpush2.xpose.msra.mxu0 0.0
        %1483 = vmatprep.subr.mxu0 0.0
        %1484 = vmatpush2.xpose.msra.mxu0 0.0
        %1485 = vmatprep.mubr.f32.mxu0 0.0
        %1486 = vmatmul.mubr.f32.gmra.mxu0 %v1395
        %v1487 = vpop.f32.mrf.mxu0
        %v1488 = vadd.f32 0.0, %v1487
        %v1489 = vpop.f32.mrf.mxu0
        %1490 = vdwg.mxu0
        %1492 = vrot.lane.b32.xlu0 %v1488, 120
        %v1493 = vpop.permute.xlu0 %1492
        %1495 = vrot.lane.b32.xlu0 %v1488, 112
        %v1496 = vpop.permute.xlu0 %1495
        %1498 = vrot.lane.b32.xlu0 %v1488, 104
        %v1499 = vpop.permute.xlu0 %1498
        %1501 = vrot.lane.b32.xlu0 %v1488, 96
        %v1502 = vpop.permute.xlu0 %1501
        %1504 = vrot.lane.b32.xlu0 %v1488, 88
        %v1505 = vpop.permute.xlu0 %1504
        %1507 = vrot.lane.b32.xlu0 %v1488, 80
        %v1508 = vpop.permute.xlu0 %1507
        %1510 = vrot.lane.b32.xlu0 %v1488, 72
        %v1511 = vpop.permute.xlu0 %1510
        %v1513 = vcombine.low %v1488, %v1496
        %v1515 = vunpack.c.l.s4 1983009808
        %v1516 = vunpack.c.0.s8 %v1515
        %v1517 = vlaneseq
        %v1518 = vshrl.u32 %v1517, 7
        %v1519 = vsub.s32 %v1516, %v1518
        %v1520 = vrot.slane %v1513, %v1519
        %v1521 = vcombine.low %v1493, %v1499
        %v1523 = vunpack.c.l.s4 1983009808
        %v1524 = vunpack.c.0.s8 %v1523
        %v1525 = vlaneseq
        %v1526 = vshrl.u32 %v1525, 7
        %v1527 = vsub.s32 %v1524, %v1526
        %v1528 = vrot.slane %v1521, %v1527
        %v1529 = vcombine.low %v1502, %v1508
        %v1531 = vunpack.c.l.s4 1983009808
        %v1532 = vunpack.c.0.s8 %v1531
        %v1533 = vlaneseq
        %v1534 = vshrl.u32 %v1533, 7
        %v1535 = vsub.s32 %v1532, %v1534
        %v1536 = vrot.slane %v1529, %v1535
        %v1537 = vcombine.low %v1505, %v1511
        %v1539 = vunpack.c.l.s4 1983009808
        %v1540 = vunpack.c.0.s8 %v1539
        %v1541 = vlaneseq
        %v1542 = vshrl.u32 %v1541, 7
        %v1543 = vsub.s32 %v1540, %v1542
        %v1544 = vrot.slane %v1537, %v1543
        %v1545 = vcombine.low %v1520, %v1528
        %v1546 = vcombine.high %v1520, %v1528
        %v1548 = vunpack.c.l.s4 1934713408
        %v1549 = vunpack.c.0.s8 %v1548
        %v1550 = vlaneseq
        %v1551 = vshrl.u32 %v1550, 7
        %v1552 = vsub.s32 %v1549, %v1551
        %v1553 = vrot.slane %v1545, %v1552
        %v1555 = vunpack.c.l.s4 1934713408
        %v1556 = vunpack.c.0.s8 %v1555
        %v1557 = vlaneseq
        %v1558 = vshrl.u32 %v1557, 7
        %v1559 = vsub.s32 %v1556, %v1558
        %v1560 = vrot.slane %v1546, %v1559
        %v1561 = vcombine.low %v1536, %v1544
        %v1562 = vcombine.high %v1536, %v1544
        %v1564 = vunpack.c.l.s4 1934713408
        %v1565 = vunpack.c.0.s8 %v1564
        %v1566 = vlaneseq
        %v1567 = vshrl.u32 %v1566, 7
        %v1568 = vsub.s32 %v1565, %v1567
        %v1569 = vrot.slane %v1561, %v1568
        %v1571 = vunpack.c.l.s4 1934713408
        %v1572 = vunpack.c.0.s8 %v1571
        %v1573 = vlaneseq
        %v1574 = vshrl.u32 %v1573, 7
        %v1575 = vsub.s32 %v1572, %v1574
        %v1576 = vrot.slane %v1562, %v1575
        %v1577 = vcombine.low %v1553, %v1569
        %v1578 = vcombine.high %v1553, %v1569
        %v1579 = vcombine.low %v1560, %v1576
        %v1580 = vcombine.high %v1560, %v1576
        %vm1581 = vcmask 64512
        %v1583 = vsel %vm1581, %v1237, 0
        %v1586 = vsel %vm1581, %v1241, 0
        %1588 = vmatprep.subr.mxu0 0.0
        %1589 = vmatpush1.xpose.msra.mxu0 0.0
        %1590 = vmatprep.subr.mxu0 0.0
        %1591 = vmatpush1.xpose.msra.mxu0 0.0
        %1592 = vmatprep.subr.mxu0 0.0
        %1593 = vmatpush1.xpose.msra.mxu0 0.0
        %1594 = vmatprep.subr.mxu0 0.0
        %1595 = vmatpush1.xpose.msra.mxu0 0.0
        %1596 = vmatprep.subr.mxu0 0.0
        %1597 = vmatpush1.xpose.msra.mxu0 0.0
        %1598 = vmatprep.subr.mxu0 0.0
        %1599 = vmatpush1.xpose.msra.mxu0 0.0
        %1600 = vmatprep.subr.mxu0 0.0
        %1601 = vmatpush1.xpose.msra.mxu0 0.0
        %1602 = vmatprep.subr.mxu0 0.0
        %1603 = vmatpush1.xpose.msra.mxu0 0.0
        %1604 = vmatprep.subr.mxu0 0.0
        %1605 = vmatpush1.xpose.msra.mxu0 0.0
        %1606 = vmatprep.subr.mxu0 0.0
        %1607 = vmatpush1.xpose.msra.mxu0 0.0
        %1608 = vmatprep.subr.mxu0 0.0
        %1609 = vmatpush1.xpose.msra.mxu0 0.0
        %1610 = vmatprep.subr.mxu0 0.0
        %1611 = vmatpush1.xpose.msra.mxu0 0.0
        %1612 = vmatprep.subr.mxu0 0.0
        %1613 = vmatpush1.xpose.msra.mxu0 0.0
        %1614 = vmatprep.subr.mxu0 0.0
        %1615 = vmatpush1.xpose.msra.mxu0 0.0
        %1616 = vmatprep.subr.mxu0 0.0
        %1617 = vmatpush1.xpose.msra.mxu0 0.0
        %1618 = vmatprep.subr.mxu0 0.0
        %1619 = vmatpush1.xpose.msra.mxu0 %v1586
        %1620 = vmatprep.subr.mxu0 0.0
        %1621 = vmatpush2.xpose.msra.mxu0 0.0
        %1622 = vmatprep.subr.mxu0 0.0
        %1623 = vmatpush2.xpose.msra.mxu0 0.0
        %1624 = vmatprep.subr.mxu0 0.0
        %1625 = vmatpush2.xpose.msra.mxu0 0.0
        %1626 = vmatprep.subr.mxu0 0.0
        %1627 = vmatpush2.xpose.msra.mxu0 0.0
        %1628 = vmatprep.subr.mxu0 0.0
        %1629 = vmatpush2.xpose.msra.mxu0 0.0
        %1630 = vmatprep.subr.mxu0 0.0
        %1631 = vmatpush2.xpose.msra.mxu0 0.0
        %1632 = vmatprep.subr.mxu0 0.0
        %1633 = vmatpush2.xpose.msra.mxu0 0.0
        %1634 = vmatprep.subr.mxu0 0.0
        %1635 = vmatpush2.xpose.msra.mxu0 0.0
        %1636 = vmatprep.subr.mxu0 0.0
        %1637 = vmatpush2.xpose.msra.mxu0 0.0
        %1638 = vmatprep.subr.mxu0 0.0
        %1639 = vmatpush2.xpose.msra.mxu0 0.0
        %1640 = vmatprep.subr.mxu0 0.0
        %1641 = vmatpush2.xpose.msra.mxu0 0.0
        %1642 = vmatprep.subr.mxu0 0.0
        %1643 = vmatpush2.xpose.msra.mxu0 0.0
        %1644 = vmatprep.subr.mxu0 0.0
        %1645 = vmatpush2.xpose.msra.mxu0 0.0
        %1646 = vmatprep.subr.mxu0 0.0
        %1647 = vmatpush2.xpose.msra.mxu0 0.0
        %1648 = vmatprep.subr.mxu0 0.0
        %1649 = vmatpush2.xpose.msra.mxu0 0.0
        %1650 = vmatprep.subr.mxu0 0.0
        %1651 = vmatpush2.xpose.msra.mxu0 0.0
        %1652 = vmatprep.mubr.f32.mxu0 0.0
        %1653 = vmatmul.mubr.f32.gmra.mxu0 %v1583
        %v1654 = vpop.f32.mrf.mxu0
        %v1655 = vadd.f32 %v1577, %v1654
        %v1656 = vpop.f32.mrf.mxu0
        %1657 = vdwg.mxu0
        %v1659 = vsel %vm1581, %v1238, 0
        %v1662 = vsel %vm1581, %v1242, 0
        %1664 = vmatprep.subr.mxu0 0.0
        %1665 = vmatpush1.xpose.msra.mxu0 0.0
        %1666 = vmatprep.subr.mxu0 0.0
        %1667 = vmatpush1.xpose.msra.mxu0 0.0
        %1668 = vmatprep.subr.mxu0 0.0
        %1669 = vmatpush1.xpose.msra.mxu0 0.0
        %1670 = vmatprep.subr.mxu0 0.0
        %1671 = vmatpush1.xpose.msra.mxu0 0.0
        %1672 = vmatprep.subr.mxu0 0.0
        %1673 = vmatpush1.xpose.msra.mxu0 0.0
        %1674 = vmatprep.subr.mxu0 0.0
        %1675 = vmatpush1.xpose.msra.mxu0 0.0
        %1676 = vmatprep.subr.mxu0 0.0
        %1677 = vmatpush1.xpose.msra.mxu0 0.0
        %1678 = vmatprep.subr.mxu0 0.0
        %1679 = vmatpush1.xpose.msra.mxu0 0.0
        %1680 = vmatprep.subr.mxu0 0.0
        %1681 = vmatpush1.xpose.msra.mxu0 0.0
        %1682 = vmatprep.subr.mxu0 0.0
        %1683 = vmatpush1.xpose.msra.mxu0 0.0
        %1684 = vmatprep.subr.mxu0 0.0
        %1685 = vmatpush1.xpose.msra.mxu0 0.0
        %1686 = vmatprep.subr.mxu0 0.0
        %1687 = vmatpush1.xpose.msra.mxu0 0.0
        %1688 = vmatprep.subr.mxu0 0.0
        %1689 = vmatpush1.xpose.msra.mxu0 0.0
        %1690 = vmatprep.subr.mxu0 0.0
        %1691 = vmatpush1.xpose.msra.mxu0 0.0
        %1692 = vmatprep.subr.mxu0 0.0
        %1693 = vmatpush1.xpose.msra.mxu0 0.0
        %1694 = vmatprep.subr.mxu0 0.0
        %1695 = vmatpush1.xpose.msra.mxu0 %v1662
        %1696 = vmatprep.subr.mxu0 0.0
        %1697 = vmatpush2.xpose.msra.mxu0 0.0
        %1698 = vmatprep.subr.mxu0 0.0
        %1699 = vmatpush2.xpose.msra.mxu0 0.0
        %1700 = vmatprep.subr.mxu0 0.0
        %1701 = vmatpush2.xpose.msra.mxu0 0.0
        %1702 = vmatprep.subr.mxu0 0.0
        %1703 = vmatpush2.xpose.msra.mxu0 0.0
        %1704 = vmatprep.subr.mxu0 0.0
        %1705 = vmatpush2.xpose.msra.mxu0 0.0
        %1706 = vmatprep.subr.mxu0 0.0
        %1707 = vmatpush2.xpose.msra.mxu0 0.0
        %1708 = vmatprep.subr.mxu0 0.0
        %1709 = vmatpush2.xpose.msra.mxu0 0.0
        %1710 = vmatprep.subr.mxu0 0.0
        %1711 = vmatpush2.xpose.msra.mxu0 0.0
        %1712 = vmatprep.subr.mxu0 0.0
        %1713 = vmatpush2.xpose.msra.mxu0 0.0
        %1714 = vmatprep.subr.mxu0 0.0
        %1715 = vmatpush2.xpose.msra.mxu0 0.0
        %1716 = vmatprep.subr.mxu0 0.0
        %1717 = vmatpush2.xpose.msra.mxu0 0.0
        %1718 = vmatprep.subr.mxu0 0.0
        %1719 = vmatpush2.xpose.msra.mxu0 0.0
        %1720 = vmatprep.subr.mxu0 0.0
        %1721 = vmatpush2.xpose.msra.mxu0 0.0
        %1722 = vmatprep.subr.mxu0 0.0
        %1723 = vmatpush2.xpose.msra.mxu0 0.0
        %1724 = vmatprep.subr.mxu0 0.0
        %1725 = vmatpush2.xpose.msra.mxu0 0.0
        %1726 = vmatprep.subr.mxu0 0.0
        %1727 = vmatpush2.xpose.msra.mxu0 0.0
        %1728 = vmatprep.mubr.f32.mxu0 0.0
        %1729 = vmatmul.mubr.f32.gmra.mxu0 %v1659
        %v1730 = vpop.f32.mrf.mxu0
        %v1731 = vadd.f32 %v1578, %v1730
        %v1732 = vpop.f32.mrf.mxu0
        %1733 = vdwg.mxu0
        %v1735 = vsel %vm1581, %v1239, 0
        %v1738 = vsel %vm1581, %v1243, 0
        %1740 = vmatprep.subr.mxu0 0.0
        %1741 = vmatpush1.xpose.msra.mxu0 0.0
        %1742 = vmatprep.subr.mxu0 0.0
        %1743 = vmatpush1.xpose.msra.mxu0 0.0
        %1744 = vmatprep.subr.mxu0 0.0
        %1745 = vmatpush1.xpose.msra.mxu0 0.0
        %1746 = vmatprep.subr.mxu0 0.0
        %1747 = vmatpush1.xpose.msra.mxu0 0.0
        %1748 = vmatprep.subr.mxu0 0.0
        %1749 = vmatpush1.xpose.msra.mxu0 0.0
        %1750 = vmatprep.subr.mxu0 0.0
        %1751 = vmatpush1.xpose.msra.mxu0 0.0
        %1752 = vmatprep.subr.mxu0 0.0
        %1753 = vmatpush1.xpose.msra.mxu0 0.0
        %1754 = vmatprep.subr.mxu0 0.0
        %1755 = vmatpush1.xpose.msra.mxu0 0.0
        %1756 = vmatprep.subr.mxu0 0.0
        %1757 = vmatpush1.xpose.msra.mxu0 0.0
        %1758 = vmatprep.subr.mxu0 0.0
        %1759 = vmatpush1.xpose.msra.mxu0 0.0
        %1760 = vmatprep.subr.mxu0 0.0
        %1761 = vmatpush1.xpose.msra.mxu0 0.0
        %1762 = vmatprep.subr.mxu0 0.0
        %1763 = vmatpush1.xpose.msra.mxu0 0.0
        %1764 = vmatprep.subr.mxu0 0.0
        %1765 = vmatpush1.xpose.msra.mxu0 0.0
        %1766 = vmatprep.subr.mxu0 0.0
        %1767 = vmatpush1.xpose.msra.mxu0 0.0
        %1768 = vmatprep.subr.mxu0 0.0
        %1769 = vmatpush1.xpose.msra.mxu0 0.0
        %1770 = vmatprep.subr.mxu0 0.0
        %1771 = vmatpush1.xpose.msra.mxu0 %v1738
        %1772 = vmatprep.subr.mxu0 0.0
        %1773 = vmatpush2.xpose.msra.mxu0 0.0
        %1774 = vmatprep.subr.mxu0 0.0
        %1775 = vmatpush2.xpose.msra.mxu0 0.0
        %1776 = vmatprep.subr.mxu0 0.0
        %1777 = vmatpush2.xpose.msra.mxu0 0.0
        %1778 = vmatprep.subr.mxu0 0.0
        %1779 = vmatpush2.xpose.msra.mxu0 0.0
        %1780 = vmatprep.subr.mxu0 0.0
        %1781 = vmatpush2.xpose.msra.mxu0 0.0
        %1782 = vmatprep.subr.mxu0 0.0
        %1783 = vmatpush2.xpose.msra.mxu0 0.0
        %1784 = vmatprep.subr.mxu0 0.0
        %1785 = vmatpush2.xpose.msra.mxu0 0.0
        %1786 = vmatprep.subr.mxu0 0.0
        %1787 = vmatpush2.xpose.msra.mxu0 0.0
        %1788 = vmatprep.subr.mxu0 0.0
        %1789 = vmatpush2.xpose.msra.mxu0 0.0
        %1790 = vmatprep.subr.mxu0 0.0
        %1791 = vmatpush2.xpose.msra.mxu0 0.0
        %1792 = vmatprep.subr.mxu0 0.0
        %1793 = vmatpush2.xpose.msra.mxu0 0.0
        %1794 = vmatprep.subr.mxu0 0.0
        %1795 = vmatpush2.xpose.msra.mxu0 0.0
        %1796 = vmatprep.subr.mxu0 0.0
        %1797 = vmatpush2.xpose.msra.mxu0 0.0
        %1798 = vmatprep.subr.mxu0 0.0
        %1799 = vmatpush2.xpose.msra.mxu0 0.0
        %1800 = vmatprep.subr.mxu0 0.0
        %1801 = vmatpush2.xpose.msra.mxu0 0.0
        %1802 = vmatprep.subr.mxu0 0.0
        %1803 = vmatpush2.xpose.msra.mxu0 0.0
        %1804 = vmatprep.mubr.f32.mxu0 0.0
        %1805 = vmatmul.mubr.f32.gmra.mxu0 %v1735
        %v1806 = vpop.f32.mrf.mxu0
        %v1807 = vadd.f32 %v1579, %v1806
        %v1808 = vpop.f32.mrf.mxu0
        %1809 = vdwg.mxu0
        %v1811 = vsel %vm1581, %v1240, 0
        %v1814 = vsel %vm1581, %v1244, 0
        %1816 = vmatprep.subr.mxu0 0.0
        %1817 = vmatpush1.xpose.msra.mxu0 0.0
        %1818 = vmatprep.subr.mxu0 0.0
        %1819 = vmatpush1.xpose.msra.mxu0 0.0
        %1820 = vmatprep.subr.mxu0 0.0
        %1821 = vmatpush1.xpose.msra.mxu0 0.0
        %1822 = vmatprep.subr.mxu0 0.0
        %1823 = vmatpush1.xpose.msra.mxu0 0.0
        %1824 = vmatprep.subr.mxu0 0.0
        %1825 = vmatpush1.xpose.msra.mxu0 0.0
        %1826 = vmatprep.subr.mxu0 0.0
        %1827 = vmatpush1.xpose.msra.mxu0 0.0
        %1828 = vmatprep.subr.mxu0 0.0
        %1829 = vmatpush1.xpose.msra.mxu0 0.0
        %1830 = vmatprep.subr.mxu0 0.0
        %1831 = vmatpush1.xpose.msra.mxu0 0.0
        %1832 = vmatprep.subr.mxu0 0.0
        %1833 = vmatpush1.xpose.msra.mxu0 0.0
        %1834 = vmatprep.subr.mxu0 0.0
        %1835 = vmatpush1.xpose.msra.mxu0 0.0
        %1836 = vmatprep.subr.mxu0 0.0
        %1837 = vmatpush1.xpose.msra.mxu0 0.0
        %1838 = vmatprep.subr.mxu0 0.0
        %1839 = vmatpush1.xpose.msra.mxu0 0.0
        %1840 = vmatprep.subr.mxu0 0.0
        %1841 = vmatpush1.xpose.msra.mxu0 0.0
        %1842 = vmatprep.subr.mxu0 0.0
        %1843 = vmatpush1.xpose.msra.mxu0 0.0
        %1844 = vmatprep.subr.mxu0 0.0
        %1845 = vmatpush1.xpose.msra.mxu0 0.0
        %1846 = vmatprep.subr.mxu0 0.0
        %1847 = vmatpush1.xpose.msra.mxu0 %v1814
        %1848 = vmatprep.subr.mxu0 0.0
        %1849 = vmatpush2.xpose.msra.mxu0 0.0
        %1850 = vmatprep.subr.mxu0 0.0
        %1851 = vmatpush2.xpose.msra.mxu0 0.0
        %1852 = vmatprep.subr.mxu0 0.0
        %1853 = vmatpush2.xpose.msra.mxu0 0.0
        %1854 = vmatprep.subr.mxu0 0.0
        %1855 = vmatpush2.xpose.msra.mxu0 0.0
        %1856 = vmatprep.subr.mxu0 0.0
        %1857 = vmatpush2.xpose.msra.mxu0 0.0
        %1858 = vmatprep.subr.mxu0 0.0
        %1859 = vmatpush2.xpose.msra.mxu0 0.0
        %1860 = vmatprep.subr.mxu0 0.0
        %1861 = vmatpush2.xpose.msra.mxu0 0.0
        %1862 = vmatprep.subr.mxu0 0.0
        %1863 = vmatpush2.xpose.msra.mxu0 0.0
        %1864 = vmatprep.subr.mxu0 0.0
        %1865 = vmatpush2.xpose.msra.mxu0 0.0
        %1866 = vmatprep.subr.mxu0 0.0
        %1867 = vmatpush2.xpose.msra.mxu0 0.0
        %1868 = vmatprep.subr.mxu0 0.0
        %1869 = vmatpush2.xpose.msra.mxu0 0.0
        %1870 = vmatprep.subr.mxu0 0.0
        %1871 = vmatpush2.xpose.msra.mxu0 0.0
        %1872 = vmatprep.subr.mxu0 0.0
        %1873 = vmatpush2.xpose.msra.mxu0 0.0
        %1874 = vmatprep.subr.mxu0 0.0
        %1875 = vmatpush2.xpose.msra.mxu0 0.0
        %1876 = vmatprep.subr.mxu0 0.0
        %1877 = vmatpush2.xpose.msra.mxu0 0.0
        %1878 = vmatprep.subr.mxu0 0.0
        %1879 = vmatpush2.xpose.msra.mxu0 0.0
        %1880 = vmatprep.mubr.f32.mxu0 0.0
        %1881 = vmatmul.mubr.f32.gmra.mxu0 %v1811
        %v1882 = vpop.f32.mrf.mxu0
        %v1883 = vadd.f32 %v1580, %v1882
        %v1884 = vpop.f32.mrf.mxu0
        %1885 = vdwg.mxu0
        %v1886 = vsel %vm1581, %v1655, -inf
        %1887 = vmax.xlane.f32.xlu0 %v1886
        %v1888 = vpop.xlane.xlu0 %1887
        %v1889 = vsel %vm1581, %v1731, -inf
        %1890 = vmax.xlane.f32.xlu0 %v1889
        %v1891 = vpop.xlane.xlu0 %1890
        %v1892 = vsel %vm1581, %v1807, -inf
        %1893 = vmax.xlane.f32.xlu0 %v1892
        %v1894 = vpop.xlane.xlu0 %1893
        %v1895 = vsel %vm1581, %v1883, -inf
        %1896 = vmax.xlane.f32.xlu0 %v1895
        %v1897 = vpop.xlane.xlu0 %1896
        %v1898 = vsub.f32 %v1655, %v1888
        %v1899 = vsub.f32 %v1731, %v1891
        %v1900 = vsub.f32 %v1807, %v1894
        %v1901 = vsub.f32 %v1883, %v1897
        %v1902 = vmul.f32 %v1898, 1.442695
        %v1903 = vpow.pop %v1902
        %v1904 = vmul.f32 %v1899, 1.442695
        %v1905 = vpow.pop %v1904
        %v1906 = vmul.f32 %v1900, 1.442695
        %v1907 = vpow.pop %v1906
        %v1908 = vmul.f32 %v1901, 1.442695
        %v1909 = vpow.pop %v1908
        %v1910 = vsel %vm1581, %v1903, 0.0
        %1911 = vadd.xlane.f32.xlu0 %v1910
        %v1912 = vpop.xlane.xlu0 %1911
        %v1913 = vsel %vm1581, %v1905, 0.0
        %1914 = vadd.xlane.f32.xlu0 %v1913
        %v1915 = vpop.xlane.xlu0 %1914
        %v1916 = vsel %vm1581, %v1907, 0.0
        %1917 = vadd.xlane.f32.xlu0 %v1916
        %v1918 = vpop.xlane.xlu0 %1917
        %v1919 = vsel %vm1581, %v1909, 0.0
        %1920 = vadd.xlane.f32.xlu0 %v1919
        %v1921 = vpop.xlane.xlu0 %1920
        %v1923 = vsel %vm1581, %v1903, 0
        %1925 = vmatprep.subr.mxu0 0.0
        %1926 = vmatpush1.msra.mxu0 0.0
        %1927 = vmatprep.subr.mxu0 0.0
        %1928 = vmatpush1.msra.mxu0 0.0
        %1929 = vmatprep.subr.mxu0 0.0
        %1930 = vmatpush1.msra.mxu0 0.0
        %1931 = vmatprep.subr.mxu0 0.0
        %1932 = vmatpush1.msra.mxu0 0.0
        %1933 = vmatprep.subr.mxu0 0.0
        %1934 = vmatpush1.msra.mxu0 0.0
        %1935 = vmatprep.subr.mxu0 0.0
        %1936 = vmatpush1.msra.mxu0 0.0
        %1937 = vmatprep.subr.mxu0 0.0
        %1938 = vmatpush1.msra.mxu0 0.0
        %1939 = vmatprep.subr.mxu0 0.0
        %1940 = vmatpush1.msra.mxu0 0.0
        %1941 = vmatprep.subr.mxu0 0.0
        %1942 = vmatpush1.msra.mxu0 0.0
        %1943 = vmatprep.subr.mxu0 0.0
        %1944 = vmatpush1.msra.mxu0 0.0
        %1945 = vmatprep.subr.mxu0 0.0
        %1946 = vmatpush1.msra.mxu0 0.0
        %1947 = vmatprep.subr.mxu0 0.0
        %1948 = vmatpush1.msra.mxu0 0.0
        %1949 = vmatprep.subr.mxu0 0.0
        %1950 = vmatpush1.msra.mxu0 0.0
        %1951 = vmatprep.subr.mxu0 0.0
        %1952 = vmatpush1.msra.mxu0 0.0
        %1953 = vmatprep.subr.mxu0 0.0
        %1954 = vmatpush1.msra.mxu0 0.0
        %1955 = vmatprep.subr.mxu0 0.0
        %1956 = vmatpush1.msra.mxu0 %v1245
        %1957 = vmatprep.subr.mxu0 0.0
        %1958 = vmatpush2.msra.mxu0 0.0
        %1959 = vmatprep.subr.mxu0 0.0
        %1960 = vmatpush2.msra.mxu0 0.0
        %1961 = vmatprep.subr.mxu0 0.0
        %1962 = vmatpush2.msra.mxu0 0.0
        %1963 = vmatprep.subr.mxu0 0.0
        %1964 = vmatpush2.msra.mxu0 0.0
        %1965 = vmatprep.subr.mxu0 0.0
        %1966 = vmatpush2.msra.mxu0 0.0
        %1967 = vmatprep.subr.mxu0 0.0
        %1968 = vmatpush2.msra.mxu0 0.0
        %1969 = vmatprep.subr.mxu0 0.0
        %1970 = vmatpush2.msra.mxu0 0.0
        %1971 = vmatprep.subr.mxu0 0.0
        %1972 = vmatpush2.msra.mxu0 0.0
        %1973 = vmatprep.subr.mxu0 0.0
        %1974 = vmatpush2.msra.mxu0 0.0
        %1975 = vmatprep.subr.mxu0 0.0
        %1976 = vmatpush2.msra.mxu0 0.0
        %1977 = vmatprep.subr.mxu0 0.0
        %1978 = vmatpush2.msra.mxu0 0.0
        %1979 = vmatprep.subr.mxu0 0.0
        %1980 = vmatpush2.msra.mxu0 0.0
        %1981 = vmatprep.subr.mxu0 0.0
        %1982 = vmatpush2.msra.mxu0 0.0
        %1983 = vmatprep.subr.mxu0 0.0
        %1984 = vmatpush2.msra.mxu0 0.0
        %1985 = vmatprep.subr.mxu0 0.0
        %1986 = vmatpush2.msra.mxu0 0.0
        %1987 = vmatprep.subr.mxu0 0.0
        %1988 = vmatpush2.msra.mxu0 0.0
        %1989 = vmatprep.mubr.f32.mxu0 0.0
        %1990 = vmatmul.mubr.f32.gmra.mxu0 %v1923
        %v1991 = vpop.f32.mrf.mxu0
        %v1992 = vadd.f32 0.0, %v1991
        %v1993 = vpop.f32.mrf.mxu0
        %1994 = vdwg.mxu0
        %v1996 = vsel %vm1581, %v1905, 0
        %1998 = vmatprep.subr.mxu0 0.0
        %1999 = vmatpush1.msra.mxu0 0.0
        %2000 = vmatprep.subr.mxu0 0.0
        %2001 = vmatpush1.msra.mxu0 0.0
        %2002 = vmatprep.subr.mxu0 0.0
        %2003 = vmatpush1.msra.mxu0 0.0
        %2004 = vmatprep.subr.mxu0 0.0
        %2005 = vmatpush1.msra.mxu0 0.0
        %2006 = vmatprep.subr.mxu0 0.0
        %2007 = vmatpush1.msra.mxu0 0.0
        %2008 = vmatprep.subr.mxu0 0.0
        %2009 = vmatpush1.msra.mxu0 0.0
        %2010 = vmatprep.subr.mxu0 0.0
        %2011 = vmatpush1.msra.mxu0 0.0
        %2012 = vmatprep.subr.mxu0 0.0
        %2013 = vmatpush1.msra.mxu0 0.0
        %2014 = vmatprep.subr.mxu0 0.0
        %2015 = vmatpush1.msra.mxu0 0.0
        %2016 = vmatprep.subr.mxu0 0.0
        %2017 = vmatpush1.msra.mxu0 0.0
        %2018 = vmatprep.subr.mxu0 0.0
        %2019 = vmatpush1.msra.mxu0 0.0
        %2020 = vmatprep.subr.mxu0 0.0
        %2021 = vmatpush1.msra.mxu0 0.0
        %2022 = vmatprep.subr.mxu0 0.0
        %2023 = vmatpush1.msra.mxu0 0.0
        %2024 = vmatprep.subr.mxu0 0.0
        %2025 = vmatpush1.msra.mxu0 0.0
        %2026 = vmatprep.subr.mxu0 0.0
        %2027 = vmatpush1.msra.mxu0 0.0
        %2028 = vmatprep.subr.mxu0 0.0
        %2029 = vmatpush1.msra.mxu0 %v1246
        %2030 = vmatprep.subr.mxu0 0.0
        %2031 = vmatpush2.msra.mxu0 0.0
        %2032 = vmatprep.subr.mxu0 0.0
        %2033 = vmatpush2.msra.mxu0 0.0
        %2034 = vmatprep.subr.mxu0 0.0
        %2035 = vmatpush2.msra.mxu0 0.0
        %2036 = vmatprep.subr.mxu0 0.0
        %2037 = vmatpush2.msra.mxu0 0.0
        %2038 = vmatprep.subr.mxu0 0.0
        %2039 = vmatpush2.msra.mxu0 0.0
        %2040 = vmatprep.subr.mxu0 0.0
        %2041 = vmatpush2.msra.mxu0 0.0
        %2042 = vmatprep.subr.mxu0 0.0
        %2043 = vmatpush2.msra.mxu0 0.0
        %2044 = vmatprep.subr.mxu0 0.0
        %2045 = vmatpush2.msra.mxu0 0.0
        %2046 = vmatprep.subr.mxu0 0.0
        %2047 = vmatpush2.msra.mxu0 0.0
        %2048 = vmatprep.subr.mxu0 0.0
        %2049 = vmatpush2.msra.mxu0 0.0
        %2050 = vmatprep.subr.mxu0 0.0
        %2051 = vmatpush2.msra.mxu0 0.0
        %2052 = vmatprep.subr.mxu0 0.0
        %2053 = vmatpush2.msra.mxu0 0.0
        %2054 = vmatprep.subr.mxu0 0.0
        %2055 = vmatpush2.msra.mxu0 0.0
        %2056 = vmatprep.subr.mxu0 0.0
        %2057 = vmatpush2.msra.mxu0 0.0
        %2058 = vmatprep.subr.mxu0 0.0
        %2059 = vmatpush2.msra.mxu0 0.0
        %2060 = vmatprep.subr.mxu0 0.0
        %2061 = vmatpush2.msra.mxu0 0.0
        %2062 = vmatprep.mubr.f32.mxu0 0.0
        %2063 = vmatmul.mubr.f32.gmra.mxu0 %v1996
        %v2064 = vpop.f32.mrf.mxu0
        %v2065 = vadd.f32 0.0, %v2064
        %v2066 = vpop.f32.mrf.mxu0
        %2067 = vdwg.mxu0
        %v2069 = vsel %vm1581, %v1907, 0
        %2071 = vmatprep.subr.mxu0 0.0
        %2072 = vmatpush1.msra.mxu0 0.0
        %2073 = vmatprep.subr.mxu0 0.0
        %2074 = vmatpush1.msra.mxu0 0.0
        %2075 = vmatprep.subr.mxu0 0.0
        %2076 = vmatpush1.msra.mxu0 0.0
        %2077 = vmatprep.subr.mxu0 0.0
        %2078 = vmatpush1.msra.mxu0 0.0
        %2079 = vmatprep.subr.mxu0 0.0
        %2080 = vmatpush1.msra.mxu0 0.0
        %2081 = vmatprep.subr.mxu0 0.0
        %2082 = vmatpush1.msra.mxu0 0.0
        %2083 = vmatprep.subr.mxu0 0.0
        %2084 = vmatpush1.msra.mxu0 0.0
        %2085 = vmatprep.subr.mxu0 0.0
        %2086 = vmatpush1.msra.mxu0 0.0
        %2087 = vmatprep.subr.mxu0 0.0
        %2088 = vmatpush1.msra.mxu0 0.0
        %2089 = vmatprep.subr.mxu0 0.0
        %2090 = vmatpush1.msra.mxu0 0.0
        %2091 = vmatprep.subr.mxu0 0.0
        %2092 = vmatpush1.msra.mxu0 0.0
        %2093 = vmatprep.subr.mxu0 0.0
        %2094 = vmatpush1.msra.mxu0 0.0
        %2095 = vmatprep.subr.mxu0 0.0
        %2096 = vmatpush1.msra.mxu0 0.0
        %2097 = vmatprep.subr.mxu0 0.0
        %2098 = vmatpush1.msra.mxu0 0.0
        %2099 = vmatprep.subr.mxu0 0.0
        %2100 = vmatpush1.msra.mxu0 0.0
        %2101 = vmatprep.subr.mxu0 0.0
        %2102 = vmatpush1.msra.mxu0 %v1247
        %2103 = vmatprep.subr.mxu0 0.0
        %2104 = vmatpush2.msra.mxu0 0.0
        %2105 = vmatprep.subr.mxu0 0.0
        %2106 = vmatpush2.msra.mxu0 0.0
        %2107 = vmatprep.subr.mxu0 0.0
        %2108 = vmatpush2.msra.mxu0 0.0
        %2109 = vmatprep.subr.mxu0 0.0
        %2110 = vmatpush2.msra.mxu0 0.0
        %2111 = vmatprep.subr.mxu0 0.0
        %2112 = vmatpush2.msra.mxu0 0.0
        %2113 = vmatprep.subr.mxu0 0.0
        %2114 = vmatpush2.msra.mxu0 0.0
        %2115 = vmatprep.subr.mxu0 0.0
        %2116 = vmatpush2.msra.mxu0 0.0
        %2117 = vmatprep.subr.mxu0 0.0
        %2118 = vmatpush2.msra.mxu0 0.0
        %2119 = vmatprep.subr.mxu0 0.0
        %2120 = vmatpush2.msra.mxu0 0.0
        %2121 = vmatprep.subr.mxu0 0.0
        %2122 = vmatpush2.msra.mxu0 0.0
        %2123 = vmatprep.subr.mxu0 0.0
        %2124 = vmatpush2.msra.mxu0 0.0
        %2125 = vmatprep.subr.mxu0 0.0
        %2126 = vmatpush2.msra.mxu0 0.0
        %2127 = vmatprep.subr.mxu0 0.0
        %2128 = vmatpush2.msra.mxu0 0.0
        %2129 = vmatprep.subr.mxu0 0.0
        %2130 = vmatpush2.msra.mxu0 0.0
        %2131 = vmatprep.subr.mxu0 0.0
        %2132 = vmatpush2.msra.mxu0 0.0
        %2133 = vmatprep.subr.mxu0 0.0
        %2134 = vmatpush2.msra.mxu0 0.0
        %2135 = vmatprep.mubr.f32.mxu0 0.0
        %2136 = vmatmul.mubr.f32.gmra.mxu0 %v2069
        %v2137 = vpop.f32.mrf.mxu0
        %v2138 = vadd.f32 0.0, %v2137
        %v2139 = vpop.f32.mrf.mxu0
        %2140 = vdwg.mxu0
        %v2142 = vsel %vm1581, %v1909, 0
        %2144 = vmatprep.subr.mxu0 0.0
        %2145 = vmatpush1.msra.mxu0 0.0
        %2146 = vmatprep.subr.mxu0 0.0
        %2147 = vmatpush1.msra.mxu0 0.0
        %2148 = vmatprep.subr.mxu0 0.0
        %2149 = vmatpush1.msra.mxu0 0.0
        %2150 = vmatprep.subr.mxu0 0.0
        %2151 = vmatpush1.msra.mxu0 0.0
        %2152 = vmatprep.subr.mxu0 0.0
        %2153 = vmatpush1.msra.mxu0 0.0
        %2154 = vmatprep.subr.mxu0 0.0
        %2155 = vmatpush1.msra.mxu0 0.0
        %2156 = vmatprep.subr.mxu0 0.0
        %2157 = vmatpush1.msra.mxu0 0.0
        %2158 = vmatprep.subr.mxu0 0.0
        %2159 = vmatpush1.msra.mxu0 0.0
        %2160 = vmatprep.subr.mxu0 0.0
        %2161 = vmatpush1.msra.mxu0 0.0
        %2162 = vmatprep.subr.mxu0 0.0
        %2163 = vmatpush1.msra.mxu0 0.0
        %2164 = vmatprep.subr.mxu0 0.0
        %2165 = vmatpush1.msra.mxu0 0.0
        %2166 = vmatprep.subr.mxu0 0.0
        %2167 = vmatpush1.msra.mxu0 0.0
        %2168 = vmatprep.subr.mxu0 0.0
        %2169 = vmatpush1.msra.mxu0 0.0
        %2170 = vmatprep.subr.mxu0 0.0
        %2171 = vmatpush1.msra.mxu0 0.0
        %2172 = vmatprep.subr.mxu0 0.0
        %2173 = vmatpush1.msra.mxu0 0.0
        %2174 = vmatprep.subr.mxu0 0.0
        %2175 = vmatpush1.msra.mxu0 %v1248
        %2176 = vmatprep.subr.mxu0 0.0
        %2177 = vmatpush2.msra.mxu0 0.0
        %2178 = vmatprep.subr.mxu0 0.0
        %2179 = vmatpush2.msra.mxu0 0.0
        %2180 = vmatprep.subr.mxu0 0.0
        %2181 = vmatpush2.msra.mxu0 0.0
        %2182 = vmatprep.subr.mxu0 0.0
        %2183 = vmatpush2.msra.mxu0 0.0
        %2184 = vmatprep.subr.mxu0 0.0
        %2185 = vmatpush2.msra.mxu0 0.0
        %2186 = vmatprep.subr.mxu0 0.0
        %2187 = vmatpush2.msra.mxu0 0.0
        %2188 = vmatprep.subr.mxu0 0.0
        %2189 = vmatpush2.msra.mxu0 0.0
        %2190 = vmatprep.subr.mxu0 0.0
        %2191 = vmatpush2.msra.mxu0 0.0
        %2192 = vmatprep.subr.mxu0 0.0
        %2193 = vmatpush2.msra.mxu0 0.0
        %2194 = vmatprep.subr.mxu0 0.0
        %2195 = vmatpush2.msra.mxu0 0.0
        %2196 = vmatprep.subr.mxu0 0.0
        %2197 = vmatpush2.msra.mxu0 0.0
        %2198 = vmatprep.subr.mxu0 0.0
        %2199 = vmatpush2.msra.mxu0 0.0
        %2200 = vmatprep.subr.mxu0 0.0
        %2201 = vmatpush2.msra.mxu0 0.0
        %2202 = vmatprep.subr.mxu0 0.0
        %2203 = vmatpush2.msra.mxu0 0.0
        %2204 = vmatprep.subr.mxu0 0.0
        %2205 = vmatpush2.msra.mxu0 0.0
        %2206 = vmatprep.subr.mxu0 0.0
        %2207 = vmatpush2.msra.mxu0 0.0
        %2208 = vmatprep.mubr.f32.mxu0 0.0
        %2209 = vmatmul.mubr.f32.gmra.mxu0 %v2142
        %v2210 = vpop.f32.mrf.mxu0
        %v2211 = vadd.f32 0.0, %v2210
        %v2212 = vpop.f32.mrf.mxu0
        %2213 = vdwg.mxu0
        %v2214 = vrcp.pop %v1912
        %v2215 = vrcp.pop %v1915
        %v2216 = vrcp.pop %v1918
        %v2217 = vrcp.pop %v1921
        %v2218 = vmul.f32 %v1992, %v2214
        %v2219 = vmul.f32 %v2065, %v2215
        %v2220 = vmul.f32 %v2138, %v2216
        %v2221 = vmul.f32 %v2211, %v2217
        %v2222 = vcombine.low %v2218, %v2220
        %v2223 = vcombine.high %v2218, %v2220
        %v2225 = vunpack.c.l.s4 1983009808
        %v2226 = vunpack.c.0.s8 %v2225
        %v2227 = vlaneseq
        %v2228 = vshrl.u32 %v2227, 7
        %v2229 = vsub.s32 %v2226, %v2228
        %v2230 = vrot.slane %v2222, %v2229
        %v2232 = vunpack.c.l.s4 1983009808
        %v2233 = vunpack.c.0.s8 %v2232
        %v2234 = vlaneseq
        %v2235 = vshrl.u32 %v2234, 7
        %v2236 = vsub.s32 %v2233, %v2235
        %v2237 = vrot.slane %v2223, %v2236
        %v2238 = vcombine.low %v2219, %v2221
        %v2239 = vcombine.high %v2219, %v2221
        %v2241 = vunpack.c.l.s4 1983009808
        %v2242 = vunpack.c.0.s8 %v2241
        %v2243 = vlaneseq
        %v2244 = vshrl.u32 %v2243, 7
        %v2245 = vsub.s32 %v2242, %v2244
        %v2246 = vrot.slane %v2238, %v2245
        %v2248 = vunpack.c.l.s4 1983009808
        %v2249 = vunpack.c.0.s8 %v2248
        %v2250 = vlaneseq
        %v2251 = vshrl.u32 %v2250, 7
        %v2252 = vsub.s32 %v2249, %v2251
        %v2253 = vrot.slane %v2239, %v2252
        %v2254 = vcombine.low %v2230, %v2246
        %v2255 = vcombine.high %v2230, %v2246
        %v2257 = vunpack.c.l.s4 1934713408
        %v2258 = vunpack.c.0.s8 %v2257
        %v2259 = vlaneseq
        %v2260 = vshrl.u32 %v2259, 7
        %v2261 = vsub.s32 %v2258, %v2260
        %v2262 = vrot.slane %v2254, %v2261
        %v2264 = vunpack.c.l.s4 1934713408
        %v2265 = vunpack.c.0.s8 %v2264
        %v2266 = vlaneseq
        %v2267 = vshrl.u32 %v2266, 7
        %v2268 = vsub.s32 %v2265, %v2267
        %v2269 = vrot.slane %v2255, %v2268
        %v2270 = vcombine.low %v2237, %v2253
        %v2271 = vcombine.high %v2237, %v2253
        %v2273 = vunpack.c.l.s4 1934713408
        %v2274 = vunpack.c.0.s8 %v2273
        %v2275 = vlaneseq
        %v2276 = vshrl.u32 %v2275, 7
        %v2277 = vsub.s32 %v2274, %v2276
        %v2278 = vrot.slane %v2270, %v2277
        %v2280 = vunpack.c.l.s4 1934713408
        %v2281 = vunpack.c.0.s8 %v2280
        %v2282 = vlaneseq
        %v2283 = vshrl.u32 %v2282, 7
        %v2284 = vsub.s32 %v2281, %v2283
        %v2285 = vrot.slane %v2271, %v2284
        %v2286 = vcombine.high %v2262, 0.0
        %v2287 = vcombine.high %v2269, 0.0
        %v2288 = vcombine.high %v2278, 0.0
        %v2289 = vcombine.high %v2285, 0.0
        %v2290 = vcombine.low %v2262, %v2269
        %v2292 = vunpack.c.l.s4 1983009808
        %v2293 = vunpack.c.0.s8 %v2292
        %v2294 = vlaneseq
        %v2295 = vshrl.u32 %v2294, 7
        %v2296 = vsub.s32 %v2293, %v2295
        %v2297 = vrot.slane %v2290, %v2296
        %v2298 = vcombine.low %v2286, %v2287
        %v2300 = vunpack.c.l.s4 1983009808
        %v2301 = vunpack.c.0.s8 %v2300
        %v2302 = vlaneseq
        %v2303 = vshrl.u32 %v2302, 7
        %v2304 = vsub.s32 %v2301, %v2303
        %v2305 = vrot.slane %v2298, %v2304
        %v2306 = vcombine.low %v2278, %v2285
        %v2308 = vunpack.c.l.s4 1983009808
        %v2309 = vunpack.c.0.s8 %v2308
        %v2310 = vlaneseq
        %v2311 = vshrl.u32 %v2310, 7
        %v2312 = vsub.s32 %v2309, %v2311
        %v2313 = vrot.slane %v2306, %v2312
        %v2314 = vcombine.low %v2288, %v2289
        %v2316 = vunpack.c.l.s4 1983009808
        %v2317 = vunpack.c.0.s8 %v2316
        %v2318 = vlaneseq
        %v2319 = vshrl.u32 %v2318, 7
        %v2320 = vsub.s32 %v2317, %v2319
        %v2321 = vrot.slane %v2314, %v2320
        %v2322 = vcombine.low %v2297, %v2305
        %v2323 = vcombine.high %v2297, %v2305
        %v2325 = vunpack.c.l.s4 1934713408
        %v2326 = vunpack.c.0.s8 %v2325
        %v2327 = vlaneseq
        %v2328 = vshrl.u32 %v2327, 7
        %v2329 = vsub.s32 %v2326, %v2328
        %v2330 = vrot.slane %v2322, %v2329
        %v2332 = vunpack.c.l.s4 1934713408
        %v2333 = vunpack.c.0.s8 %v2332
        %v2334 = vlaneseq
        %v2335 = vshrl.u32 %v2334, 7
        %v2336 = vsub.s32 %v2333, %v2335
        %v2337 = vrot.slane %v2323, %v2336
        %v2338 = vcombine.low %v2313, %v2321
        %v2339 = vcombine.high %v2313, %v2321
        %v2341 = vunpack.c.l.s4 1934713408
        %v2342 = vunpack.c.0.s8 %v2341
        %v2343 = vlaneseq
        %v2344 = vshrl.u32 %v2343, 7
        %v2345 = vsub.s32 %v2342, %v2344
        %v2346 = vrot.slane %v2338, %v2345
        %v2348 = vunpack.c.l.s4 1934713408
        %v2349 = vunpack.c.0.s8 %v2348
        %v2350 = vlaneseq
        %v2351 = vshrl.u32 %v2350, 7
        %v2352 = vsub.s32 %v2349, %v2351
        %v2353 = vrot.slane %v2339, %v2352
        %v2354 = vcombine.low %v2330, %v2346
        %v2355 = vcombine.high %v2330, %v2346
        %v2356 = vcombine.low %v2337, %v2353
        %v2357 = vcombine.high %v2337, %v2353
        %2359 = vrot.lane.b32.xlu0 %v2355, 8
        %v2360 = vpop.permute.xlu0 %2359
        %2363 = vrot.lane.b32.xlu0 %v2356, 16
        %v2364 = vpop.permute.xlu0 %2363
        %2367 = vrot.lane.b32.xlu0 %v2357, 24
        %v2368 = vpop.permute.xlu0 %2367
        %v2370 = vsel %vm1581, %v2354, %v2360
        %v2371 = vsel %vm1259, %v2370, %v2364
        %vm2372 = vcmask 195584
        %v2373 = vsel %vm2372, %v2371, %v2368
        %v2374 = vld [vmem:[#allocation13] sm:$0xff]
        %v2375 = vld [vmem:[#allocation13 + $0x8] sm:$0xff]
        %v2376 = vld [vmem:[#allocation13 + $0x10] sm:$0xff]
        %v2377 = vld [vmem:[#allocation13 + $0x18] sm:$0xff]
        %v2378 = vld [vmem:[%s8] sm:$0x1]
        %v2380 = vlaneseq
        %v2381 = vshrl.u32 %v2380, 7
        %v2382 = vsub.s32 0, %v2381
        %v2383 = vrot.slane %v2378, %v2382
        %v2386 = vsel %vm988, %v2373, 0
        %2388 = vmatprep.subr.mxu0 0.0
        %2389 = vmatpush1.msra.mxu0 0.0
        %2390 = vmatprep.subr.mxu0 0.0
        %2391 = vmatpush1.msra.mxu0 0.0
        %2392 = vmatprep.subr.mxu0 0.0
        %2393 = vmatpush1.msra.mxu0 0.0
        %2394 = vmatprep.subr.mxu0 0.0
        %2395 = vmatpush1.msra.mxu0 0.0
        %2396 = vmatprep.subr.mxu0 0.0
        %2397 = vmatpush1.msra.mxu0 0.0
        %2398 = vmatprep.subr.mxu0 0.0
        %2399 = vmatpush1.msra.mxu0 0.0
        %2400 = vmatprep.subr.mxu0 0.0
        %2401 = vmatpush1.msra.mxu0 0.0
        %2402 = vmatprep.subr.mxu0 0.0
        %2403 = vmatpush1.msra.mxu0 0.0
        %2404 = vmatprep.subr.mxu0 0.0
        %2405 = vmatpush1.msra.mxu0 0.0
        %2406 = vmatprep.subr.mxu0 0.0
        %2407 = vmatpush1.msra.mxu0 0.0
        %2408 = vmatprep.subr.mxu0 0.0
        %2409 = vmatpush1.msra.mxu0 0.0
        %2410 = vmatprep.subr.mxu0 0.0
        %2411 = vmatpush1.msra.mxu0 0.0
        %2412 = vmatprep.subr.mxu0 0.0
        %2413 = vmatpush1.msra.mxu0 %v2377
        %2414 = vmatprep.subr.mxu0 0.0
        %2415 = vmatpush1.msra.mxu0 %v2376
        %2416 = vmatprep.subr.mxu0 0.0
        %2417 = vmatpush1.msra.mxu0 %v2375
        %2418 = vmatprep.subr.mxu0 0.0
        %2419 = vmatpush1.msra.mxu0 %v2374
        %2420 = vmatprep.subr.mxu0 0.0
        %2421 = vmatpush2.msra.mxu0 0.0
        %2422 = vmatprep.subr.mxu0 0.0
        %2423 = vmatpush2.msra.mxu0 0.0
        %2424 = vmatprep.subr.mxu0 0.0
        %2425 = vmatpush2.msra.mxu0 0.0
        %2426 = vmatprep.subr.mxu0 0.0
        %2427 = vmatpush2.msra.mxu0 0.0
        %2428 = vmatprep.subr.mxu0 0.0
        %2429 = vmatpush2.msra.mxu0 0.0
        %2430 = vmatprep.subr.mxu0 0.0
        %2431 = vmatpush2.msra.mxu0 0.0
        %2432 = vmatprep.subr.mxu0 0.0
        %2433 = vmatpush2.msra.mxu0 0.0
        %2434 = vmatprep.subr.mxu0 0.0
        %2435 = vmatpush2.msra.mxu0 0.0
        %2436 = vmatprep.subr.mxu0 0.0
        %2437 = vmatpush2.msra.mxu0 0.0
        %2438 = vmatprep.subr.mxu0 0.0
        %2439 = vmatpush2.msra.mxu0 0.0
        %2440 = vmatprep.subr.mxu0 0.0
        %2441 = vmatpush2.msra.mxu0 0.0
        %2442 = vmatprep.subr.mxu0 0.0
        %2443 = vmatpush2.msra.mxu0 0.0
        %2444 = vmatprep.subr.mxu0 0.0
        %2445 = vmatpush2.msra.mxu0 0.0
        %2446 = vmatprep.subr.mxu0 0.0
        %2447 = vmatpush2.msra.mxu0 0.0
        %2448 = vmatprep.subr.mxu0 0.0
        %2449 = vmatpush2.msra.mxu0 0.0
        %2450 = vmatprep.subr.mxu0 0.0
        %2451 = vmatpush2.msra.mxu0 0.0
        %2452 = vmatprep.mubr.f32.mxu0 0.0
        %2453 = vmatmul.mubr.f32.gmra.mxu0 %v2386
        %v2454 = vpop.f32.mrf.mxu0
        %v2455 = vadd.f32 %v2383, %v2454
        %v2456 = vpop.f32.mrf.mxu0
        %2457 = vdwg.mxu0
        %2458 = vst.msk [vmem:[%s567] sm:$0xff] %vm988, %v2455
        %s2459 = sand.u32 %s327, 1
        %s2460 = scalar_lea.sflag [#allocation6], %s2459
        %s2461 = sand.u32 %s327, 1
        %s2462 = smul.addr %s2461, 8
        %s2463 = scalar_lea.vmem [#allocation15], %s2462
        // Predicated region
        $region97: #{tpu_custom_call.1} parent=67 // pred_check
          %p2464 = pneg %p337
        $region98: #{tpu_custom_call.1} parent=67 // pred_check_branch
          %2466 = sbr.rel (%p2464) target = $region100
        $region99: #{tpu_custom_call.1} parent=67 // pred_region
          %s2468 = ssub.s32 128, 128
          %2469 = vsyncadd %s2460, %s2468
          %s2470 = sadd.s32 %s39, %s38
          %s2471 = smul.addr %s2470, 128
          %s2472 = scalar_lea.hbm %s12, %s2471
          %s2474 = sshll.u32 %s2463, 4
          %s2475 = int_to_ptr.vmem [resolvable:$true] %s2474
          %2477 = dma.vmem_to_hbm [thread:$0]  %s2475, 128, %s2472, %s2460
        $region100: #{tpu_custom_call.1} parent=67 // pred_fallthru
          _
      $region68: #{tpu_custom_call.1} parent=5 // pred_fallthru
        _
      %p2478 = scmp.le.s32.totalorder 2, %s29
      // Predicated region
      $region101: #{tpu_custom_call.1} parent=5 // pred_check
        %p2479 = pneg %p2478
      $region102: #{tpu_custom_call.1} parent=5 // pred_check_branch
        %2481 = sbr.rel (%p2479) target = $region104
      $region103: #{tpu_custom_call.1} parent=5 // pred_region
        %s2482 = ssub.s32 %s29, 2
        // Predicated region
        $region105: #{tpu_custom_call.1} parent=103 // pred_check
          %p2483 = pneg %p343
        $region106: #{tpu_custom_call.1} parent=103 // pred_check_branch
          %2485 = sbr.rel (%p2483) target = $region108
        $region107: #{tpu_custom_call.1} parent=103 // pred_region
          %s2486 = sand.u32 %s328, 1
          %s2487 = scalar_lea.sflag [#allocation6], %s2486
          %s2488 = sand.u32 %s328, 1
          %s2489 = smul.addr %s2488, 8
          %s2490 = scalar_lea.vmem [#allocation15], %s2489
          %2491 = dma.done %s2487, 128
        $region108: #{tpu_custom_call.1} parent=103 // pred_fallthru
          _
      $region104: #{tpu_custom_call.1} parent=5 // pred_fallthru
        _
    $region6: #{tpu_custom_call.1} parent=1 // loop_footer
      %s33 = sadd.s32 1, %s29
    $region7: #{tpu_custom_call.1} parent=1 // loop_footer_branch
      %28 = sbr.rel target = $region3
    $region8: #{tpu_custom_call.1} parent=1 // loop_exit
      _
    %2492 = vsyncpa [#allocation5], 1
    %s2493 = scalar_lea.sflag [#allocation5], 1
    %2494 = vsyncpa %s2493, 1
    %2495 = vsyncpa [#allocation8], 1
    %s2496 = scalar_lea.sflag [#allocation8], 1
    %2497 = vsyncpa %s2496, 1
    %2498 = vsyncpa [#allocation11], 1
    %2499 = vsyncpa [#allocation14], 1
    %2500 = vsyncpa [#allocation6], 1
    %s2501 = scalar_lea.sflag [#allocation6], 1
    %2502 = vsyncpa %s2501, 1

</llo_original>
